<compile_context>
chip_gen: v6e
topology: v6e:2x2x1
jax: 0.10.0
libtpu: 0.0.40
codegen_flags: <defaults>
</compile_context>

<pallas_src>
import jax
import jax.numpy as jnp
from jax import lax
from jax.experimental import pallas as pl
from jax.experimental.pallas import tpu as pltpu


def _round_up(n, m):
    return ((n + m - 1) // m) * m


def price_rnn_kernel(x_ref,      # (T, TB, I)  raw input, time-major, zero-padded batch
                     wih0_ref,   # (I, Hp)     Wih0^T (zero-padded on Hp)
                     b0_ref,     # (1, Hp)     bih0 + bhh0
                     whh0_ref,   # (Hp, Hp)    Whh0^T
                     wih1_ref,   # (Hp, Hp)    Wih1^T
                     whh1_ref,   # (Hp, Hp)    Whh1^T
                     b1_ref,     # (1, Hp)     bih1 + bhh1
                     wfc_ref,    # (1, Hp)     fc weight row
                     bfc_ref,    # (1, 1)      fc bias
                     out_ref):   # (TB, 1)
    T, TB, I = x_ref.shape
    Hp = whh0_ref.shape[0]

    # Hoist broadcasts out of the time loop (no CSE for broadcast_in_dim).
    b0_b = jnp.broadcast_to(b0_ref[...], (TB, Hp))
    b1_b = jnp.broadcast_to(b1_ref[...], (TB, Hp))
    w0_rows = [jnp.broadcast_to(wih0_ref[i:i + 1, :], (TB, Hp)) for i in range(I)]

    h0 = jnp.zeros((TB, Hp), jnp.float32)
    h1 = jnp.zeros((TB, Hp), jnp.float32)

    def step(t, carry):
        h0, h1 = carry

        # Layer-1 hidden-path matmul issued first: h1_{t-1} is already ready, so
        # this MXU work overlaps layer-0's matmul + tanh on the serial chain.
        h1_hid = jnp.dot(h1, whh1_ref[...], preferred_element_type=jnp.float32)

        # Layer-0 input projection in-kernel (I tiny): one VPU broadcast
        # multiply-add per input feature, in an otherwise idle VALU slot.
        x_t = x_ref[t]                                     # (TB, I)
        xproj = b0_b
        for i in range(I):
            xproj = xproj + x_t[:, i:i + 1] * w0_rows[i]

        h0_new = jnp.tanh(
            xproj + jnp.dot(h0, whh0_ref[...], preferred_element_type=jnp.float32))

        # Layer 1: second half of the (previously fused) contraction; the
        # per-step concat copy is gone.
        h1_new = jnp.tanh(
            h1_hid
            + jnp.dot(h0_new, wih1_ref[...], preferred_element_type=jnp.float32)
            + b1_b)
        return h0_new, h1_new

    # Serial recurrence: bounded unroll (full unroll for T <= 8).
    _, h1_final = lax.fori_loop(0, T, step, (h0, h1), unroll=min(T, 8))

    # fc head (H -> 1): VPU/XLU lane reduction instead of an N=1 MXU matmul.
    out_ref[...] = (jnp.sum(h1_final * wfc_ref[...], axis=-1, keepdims=True)
                    + bfc_ref[...])


def price_rnn_forward(x_btI, params):
    """x_btI: (B, T, I) float32 (PyTorch batch_first layout). Returns (B, 1)."""
    B, T, I = x_btI.shape
    (wih0, whh0, bih0, bhh0, wih1, whh1, bih1, bhh1, wfc, bfc) = params
    H = whh0.shape[0]

    f32 = jnp.float32
    Hp = _round_up(max(H, 128), 128)              # hidden padded to 128-lane tiles
    TB = min(128, _round_up(max(B, 8), 8))        # batch tile (>=8 sublanes, <=128)
    Bp = _round_up(B, TB)

    def pad2(a, rows, cols):
        return jnp.zeros((rows, cols), f32).at[:a.shape[0], :a.shape[1]].set(
            a.astype(f32))

    def pad_row(v, cols):
        return jnp.zeros((1, cols), f32).at[0, :v.shape[0]].set(v.astype(f32))

    wih0_t = pad2(wih0.T, I, Hp)                  # (I, Hp)
    whh0_t = pad2(whh0.T, Hp, Hp)                 # (Hp, Hp)
    wih1_t = pad2(wih1.T, Hp, Hp)                 # (Hp, Hp)
    whh1_t = pad2(whh1.T, Hp, Hp)                 # (Hp, Hp)
    b0 = pad_row(bih0 + bhh0, Hp)                 # (1, Hp)
    b1 = pad_row(bih1 + bhh1, Hp)                 # (1, Hp)
    wfc_row = pad_row(wfc.reshape(-1), Hp)        # (1, Hp)
    bfc_11 = bfc.reshape(1, 1).astype(f32)        # (1, 1)

    # Raw time-major input, zero-padded on batch only: (T, Bp, I). Tiny — no
    # 128x-expanded xproj slab ever touches HBM.
    x_tbi = jnp.zeros((T, Bp, I), f32).at[:, :B, :].set(
        jnp.transpose(x_btI.astype(f32), (1, 0, 2)))

    # Zero padding on Hp is preserved through the recurrence (tanh(0)=0 with
    # zero-padded weights/biases); padded batch rows are sliced off at the end.
    # Note: the "parallel" batch axis only engages the second v7x TensorCore
    # once Bp // TB >= 2.
    grid = (Bp // TB,)
    out_padded = pl.pallas_call(
        price_rnn_kernel,
        out_shape=jax.ShapeDtypeStruct((Bp, 1), f32),
        grid_spec=pltpu.PrefetchScalarGridSpec(
            num_scalar_prefetch=0,
            grid=grid,
            in_specs=[
                pl.BlockSpec((T, TB, I), lambda i: (0, i, 0)),   # x batch tile
                pl.BlockSpec((I, Hp), lambda i: (0, 0)),         # Wih0^T
                pl.BlockSpec((1, Hp), lambda i: (0, 0)),         # b0
                pl.BlockSpec((Hp, Hp), lambda i: (0, 0)),        # Whh0^T
                pl.BlockSpec((Hp, Hp), lambda i: (0, 0)),        # Wih1^T
                pl.BlockSpec((Hp, Hp), lambda i: (0, 0)),        # Whh1^T
                pl.BlockSpec((1, Hp), lambda i: (0, 0)),         # b1
                pl.BlockSpec((1, Hp), lambda i: (0, 0)),         # fc row
                pl.BlockSpec((1, 1), lambda i: (0, 0)),          # fc bias
            ],
            out_specs=pl.BlockSpec((TB, 1), lambda i: (i, 0)),
        ),
        compiler_params=pltpu.CompilerParams(
            dimension_semantics=("parallel",)),
    )(x_tbi, wih0_t, b0, whh0_t, wih1_t, whh1_t, b1, wfc_row, bfc_11)
    return out_padded[:B]


def init_params(key, input_size=1, hidden_size=64):
    """Deterministic init mirroring PyTorch's U(-1/sqrt(H), 1/sqrt(H))."""
    H, I = hidden_size, input_size
    bound = 1.0 / jnp.sqrt(jnp.float32(H))
    keys = jax.random.split(key, 10)
    u = lambda k, shape: jax.random.uniform(k, shape, jnp.float32, -bound, bound)
    wih0 = u(keys[0], (H, I))
    whh0 = u(keys[1], (H, H))
    bih0 = u(keys[2], (H,))
    bhh0 = u(keys[3], (H,))
    wih1 = u(keys[4], (H, H))
    whh1 = u(keys[5], (H, H))
    bih1 = u(keys[6], (H,))
    bhh1 = u(keys[7], (H,))
    wfc = u(keys[8], (1, H))     # fc: in_features = H, out_features = 1
    bfc = u(keys[9], (1,))
    return (wih0, whh0, bih0, bhh0, wih1, whh1, bih1, bhh1, wfc, bfc)


def reference_forward(x_btI, params):
    """Pure-JAX reference replicating nn.RNN(batch_first=True, num_layers=2) + fc."""
    (wih0, whh0, bih0, bhh0, wih1, whh1, bih1, bhh1, wfc, bfc) = params
    B, T, I = x_btI.shape
    H = whh0.shape[0]
    h0 = jnp.zeros((B, H), jnp.float32)
    h1 = jnp.zeros((B, H), jnp.float32)
    for t in range(T):
        x_t = x_btI[:, t, :]
        h0 = jnp.tanh(x_t @ wih0.T + bih0 + h0 @ whh0.T + bhh0)
        h1 = jnp.tanh(h0 @ wih1.T + bih1 + h1 @ whh1.T + bhh1)
    return h1 @ wfc.T + bfc


if __name__ == "__main__":
    key = jax.random.PRNGKey(0)
    k_params, k_x = jax.random.split(key)

    B, T, I, H = 2, 8, 1, 64
    params = init_params(k_params, input_size=I, hidden_size=H)
    x = jax.random.normal(k_x, (B, T, I), jnp.float32)

    out = price_rnn_forward(x, params)
    out = jax.block_until_ready(out)

    ref = reference_forward(x, params)
    assert out.shape == (B, 1)
    assert jnp.allclose(out, ref, atol=2e-5, rtol=2e-5), (out, ref)

    print("KERNEL_OK")
</pallas_src>

<mosaic_0001>
module attributes {stable_mosaic.version = 11 : i64} {
  func.func @price_rnn_kernel(%arg0: i32, %arg1: memref<8x8x1xf32, #tpu.memory_space<vmem>>, %arg2: memref<1x128xf32, #tpu.memory_space<vmem>>, %arg3: memref<1x128xf32, #tpu.memory_space<vmem>>, %arg4: memref<128x128xf32, #tpu.memory_space<vmem>>, %arg5: memref<128x128xf32, #tpu.memory_space<vmem>>, %arg6: memref<128x128xf32, #tpu.memory_space<vmem>>, %arg7: memref<1x128xf32, #tpu.memory_space<vmem>>, %arg8: memref<1x128xf32, #tpu.memory_space<vmem>>, %arg9: memref<1x1xf32, #tpu.memory_space<vmem>>, %arg10: memref<8x1xf32, #tpu.memory_space<vmem>>) attributes {dimension_semantics = [#tpu.dimension_semantics<parallel>], iteration_bounds = array<i64: 1>, scalar_prefetch = 0 : i64, scratch_operands = 0 : i64, tpu.core_type = #tpu.core_type<tc>, window_params = [{transform_indices = @transform_0, window_bounds = array<i64: 8, 8, 1>}, {pipeline_mode = #tpu.pipeline_mode<synchronous>, transform_indices = @transform_1, window_bounds = array<i64: 1, 128>}, {pipeline_mode = #tpu.pipeline_mode<synchronous>, transform_indices = @transform_2, window_bounds = array<i64: 1, 128>}, {pipeline_mode = #tpu.pipeline_mode<synchronous>, transform_indices = @transform_3, window_bounds = array<i64: 128, 128>}, {pipeline_mode = #tpu.pipeline_mode<synchronous>, transform_indices = @transform_4, window_bounds = array<i64: 128, 128>}, {pipeline_mode = #tpu.pipeline_mode<synchronous>, transform_indices = @transform_5, window_bounds = array<i64: 128, 128>}, {pipeline_mode = #tpu.pipeline_mode<synchronous>, transform_indices = @transform_6, window_bounds = array<i64: 1, 128>}, {pipeline_mode = #tpu.pipeline_mode<synchronous>, transform_indices = @transform_7, window_bounds = array<i64: 1, 128>}, {pipeline_mode = #tpu.pipeline_mode<synchronous>, transform_indices = @transform_8, window_bounds = array<i64: 1, 1>}, {transform_indices = @transform_9, window_bounds = array<i64: 8, 1>}]} {
    %c0 = arith.constant 0 : index
    %c0_0 = arith.constant 0 : index
    %0 = vector.load %arg3[%c0, %c0_0] : memref<1x128xf32, #tpu.memory_space<vmem>>, vector<1x128xf32>
    %1 = vector.shape_cast %0 : vector<1x128xf32> to vector<1x128xf32>
    %2 = vector.broadcast %1 : vector<1x128xf32> to vector<8x128xf32>
    %c0_1 = arith.constant 0 : index
    %c0_2 = arith.constant 0 : index
    %3 = vector.load %arg7[%c0_1, %c0_2] : memref<1x128xf32, #tpu.memory_space<vmem>>, vector<1x128xf32>
    %4 = vector.shape_cast %3 : vector<1x128xf32> to vector<1x128xf32>
    %5 = vector.broadcast %4 : vector<1x128xf32> to vector<8x128xf32>
    %c0_3 = arith.constant 0 : index
    %c0_4 = arith.constant 0 : index
    %6 = vector.load %arg2[%c0_3, %c0_4] : memref<1x128xf32, #tpu.memory_space<vmem>>, vector<1x128xf32>
    %7 = vector.shape_cast %6 : vector<1x128xf32> to vector<1x128xf32>
    %8 = vector.broadcast %7 : vector<1x128xf32> to vector<8x128xf32>
    %cst = arith.constant 0.000000e+00 : f32
    %9 = vector.broadcast %cst : f32 to vector<8x128xf32>
    %cst_5 = arith.constant 0.000000e+00 : f32
    %10 = vector.broadcast %cst_5 : f32 to vector<8x128xf32>
    %c0_i32 = arith.constant 0 : i32
    %c0_6 = arith.constant 0 : index
    %c0_7 = arith.constant 0 : index
    %11 = vector.load %arg6[%c0_6, %c0_7] : memref<128x128xf32, #tpu.memory_space<vmem>>, vector<128x128xf32>
    %cst_8 = arith.constant dense<0.000000e+00> : vector<8x128xf32>
    %12 = tpu.matmul %10, %11, %cst_8 {dimension_numbers = #tpu.dot_dimension_numbers<[1], [0], [0], [1], [0, 0, 1, 1], [], []>} : vector<8x128xf32>, vector<128x128xf32>, vector<8x128xf32> -> vector<8x128xf32>
    %13 = arith.index_cast %c0_i32 : i32 to index
    %c0_9 = arith.constant 0 : index
    %c0_10 = arith.constant 0 : index
    %14 = vector.load %arg1[%13, %c0_9, %c0_10] : memref<8x8x1xf32, #tpu.memory_space<vmem>>, vector<1x8x1xf32>
    %15 = vector.shape_cast %14 : vector<1x8x1xf32> to vector<8x1xf32>
    %16 = vector.broadcast %15 : vector<8x1xf32> to vector<8x128xf32>
    %17 = arith.mulf %16, %8 : vector<8x128xf32>
    %18 = arith.addf %2, %17 : vector<8x128xf32>
    %c0_11 = arith.constant 0 : index
    %c0_12 = arith.constant 0 : index
    %19 = vector.load %arg4[%c0_11, %c0_12] : memref<128x128xf32, #tpu.memory_space<vmem>>, vector<128x128xf32>
    %cst_13 = arith.constant dense<0.000000e+00> : vector<8x128xf32>
    %20 = tpu.matmul %9, %19, %cst_13 {dimension_numbers = #tpu.dot_dimension_numbers<[1], [0], [0], [1], [0, 0, 1, 1], [], []>} : vector<8x128xf32>, vector<128x128xf32>, vector<8x128xf32> -> vector<8x128xf32>
    %21 = arith.addf %18, %20 : vector<8x128xf32>
    %22 = math.tanh %21 : vector<8x128xf32>
    %c0_14 = arith.constant 0 : index
    %c0_15 = arith.constant 0 : index
    %23 = vector.load %arg5[%c0_14, %c0_15] : memref<128x128xf32, #tpu.memory_space<vmem>>, vector<128x128xf32>
    %cst_16 = arith.constant dense<0.000000e+00> : vector<8x128xf32>
    %24 = tpu.matmul %22, %23, %cst_16 {dimension_numbers = #tpu.dot_dimension_numbers<[1], [0], [0], [1], [0, 0, 1, 1], [], []>} : vector<8x128xf32>, vector<128x128xf32>, vector<8x128xf32> -> vector<8x128xf32>
    %25 = arith.addf %12, %24 : vector<8x128xf32>
    %26 = arith.addf %25, %5 : vector<8x128xf32>
    %27 = math.tanh %26 : vector<8x128xf32>
    %c1_i32 = arith.constant 1 : i32
    %c0_17 = arith.constant 0 : index
    %c0_18 = arith.constant 0 : index
    %28 = vector.load %arg6[%c0_17, %c0_18] : memref<128x128xf32, #tpu.memory_space<vmem>>, vector<128x128xf32>
    %cst_19 = arith.constant dense<0.000000e+00> : vector<8x128xf32>
    %29 = tpu.matmul %27, %28, %cst_19 {dimension_numbers = #tpu.dot_dimension_numbers<[1], [0], [0], [1], [0, 0, 1, 1], [], []>} : vector<8x128xf32>, vector<128x128xf32>, vector<8x128xf32> -> vector<8x128xf32>
    %30 = arith.index_cast %c1_i32 : i32 to index
    %c0_20 = arith.constant 0 : index
    %c0_21 = arith.constant 0 : index
    %31 = vector.load %arg1[%30, %c0_20, %c0_21] : memref<8x8x1xf32, #tpu.memory_space<vmem>>, vector<1x8x1xf32>
    %32 = vector.shape_cast %31 : vector<1x8x1xf32> to vector<8x1xf32>
    %33 = vector.broadcast %32 : vector<8x1xf32> to vector<8x128xf32>
    %34 = arith.mulf %33, %8 : vector<8x128xf32>
    %35 = arith.addf %2, %34 : vector<8x128xf32>
    %c0_22 = arith.constant 0 : index
    %c0_23 = arith.constant 0 : index
    %36 = vector.load %arg4[%c0_22, %c0_23] : memref<128x128xf32, #tpu.memory_space<vmem>>, vector<128x128xf32>
    %cst_24 = arith.constant dense<0.000000e+00> : vector<8x128xf32>
    %37 = tpu.matmul %22, %36, %cst_24 {dimension_numbers = #tpu.dot_dimension_numbers<[1], [0], [0], [1], [0, 0, 1, 1], [], []>} : vector<8x128xf32>, vector<128x128xf32>, vector<8x128xf32> -> vector<8x128xf32>
    %38 = arith.addf %35, %37 : vector<8x128xf32>
    %39 = math.tanh %38 : vector<8x128xf32>
    %c0_25 = arith.constant 0 : index
    %c0_26 = arith.constant 0 : index
    %40 = vector.load %arg5[%c0_25, %c0_26] : memref<128x128xf32, #tpu.memory_space<vmem>>, vector<128x128xf32>
    %cst_27 = arith.constant dense<0.000000e+00> : vector<8x128xf32>
    %41 = tpu.matmul %39, %40, %cst_27 {dimension_numbers = #tpu.dot_dimension_numbers<[1], [0], [0], [1], [0, 0, 1, 1], [], []>} : vector<8x128xf32>, vector<128x128xf32>, vector<8x128xf32> -> vector<8x128xf32>
    %42 = arith.addf %29, %41 : vector<8x128xf32>
    %43 = arith.addf %42, %5 : vector<8x128xf32>
    %44 = math.tanh %43 : vector<8x128xf32>
    %c2_i32 = arith.constant 2 : i32
    %c0_28 = arith.constant 0 : index
    %c0_29 = arith.constant 0 : index
    %45 = vector.load %arg6[%c0_28, %c0_29] : memref<128x128xf32, #tpu.memory_space<vmem>>, vector<128x128xf32>
    %cst_30 = arith.constant dense<0.000000e+00> : vector<8x128xf32>
    %46 = tpu.matmul %44, %45, %cst_30 {dimension_numbers = #tpu.dot_dimension_numbers<[1], [0], [0], [1], [0, 0, 1, 1], [], []>} : vector<8x128xf32>, vector<128x128xf32>, vector<8x128xf32> -> vector<8x128xf32>
    %47 = arith.index_cast %c2_i32 : i32 to index
    %c0_31 = arith.constant 0 : index
    %c0_32 = arith.constant 0 : index
    %48 = vector.load %arg1[%47, %c0_31, %c0_32] : memref<8x8x1xf32, #tpu.memory_space<vmem>>, vector<1x8x1xf32>
    %49 = vector.shape_cast %48 : vector<1x8x1xf32> to vector<8x1xf32>
    %50 = vector.broadcast %49 : vector<8x1xf32> to vector<8x128xf32>
    %51 = arith.mulf %50, %8 : vector<8x128xf32>
    %52 = arith.addf %2, %51 : vector<8x128xf32>
    %c0_33 = arith.constant 0 : index
    %c0_34 = arith.constant 0 : index
    %53 = vector.load %arg4[%c0_33, %c0_34] : memref<128x128xf32, #tpu.memory_space<vmem>>, vector<128x128xf32>
    %cst_35 = arith.constant dense<0.000000e+00> : vector<8x128xf32>
    %54 = tpu.matmul %39, %53, %cst_35 {dimension_numbers = #tpu.dot_dimension_numbers<[1], [0], [0], [1], [0, 0, 1, 1], [], []>} : vector<8x128xf32>, vector<128x128xf32>, vector<8x128xf32> -> vector<8x128xf32>
    %55 = arith.addf %52, %54 : vector<8x128xf32>
    %56 = math.tanh %55 : vector<8x128xf32>
    %c0_36 = arith.constant 0 : index
    %c0_37 = arith.constant 0 : index
    %57 = vector.load %arg5[%c0_36, %c0_37] : memref<128x128xf32, #tpu.memory_space<vmem>>, vector<128x128xf32>
    %cst_38 = arith.constant dense<0.000000e+00> : vector<8x128xf32>
    %58 = tpu.matmul %56, %57, %cst_38 {dimension_numbers = #tpu.dot_dimension_numbers<[1], [0], [0], [1], [0, 0, 1, 1], [], []>} : vector<8x128xf32>, vector<128x128xf32>, vector<8x128xf32> -> vector<8x128xf32>
    %59 = arith.addf %46, %58 : vector<8x128xf32>
    %60 = arith.addf %59, %5 : vector<8x128xf32>
    %61 = math.tanh %60 : vector<8x128xf32>
    %c3_i32 = arith.constant 3 : i32
    %c0_39 = arith.constant 0 : index
    %c0_40 = arith.constant 0 : index
    %62 = vector.load %arg6[%c0_39, %c0_40] : memref<128x128xf32, #tpu.memory_space<vmem>>, vector<128x128xf32>
    %cst_41 = arith.constant dense<0.000000e+00> : vector<8x128xf32>
    %63 = tpu.matmul %61, %62, %cst_41 {dimension_numbers = #tpu.dot_dimension_numbers<[1], [0], [0], [1], [0, 0, 1, 1], [], []>} : vector<8x128xf32>, vector<128x128xf32>, vector<8x128xf32> -> vector<8x128xf32>
    %64 = arith.index_cast %c3_i32 : i32 to index
    %c0_42 = arith.constant 0 : index
    %c0_43 = arith.constant 0 : index
    %65 = vector.load %arg1[%64, %c0_42, %c0_43] : memref<8x8x1xf32, #tpu.memory_space<vmem>>, vector<1x8x1xf32>
    %66 = vector.shape_cast %65 : vector<1x8x1xf32> to vector<8x1xf32>
    %67 = vector.broadcast %66 : vector<8x1xf32> to vector<8x128xf32>
    %68 = arith.mulf %67, %8 : vector<8x128xf32>
    %69 = arith.addf %2, %68 : vector<8x128xf32>
    %c0_44 = arith.constant 0 : index
    %c0_45 = arith.constant 0 : index
    %70 = vector.load %arg4[%c0_44, %c0_45] : memref<128x128xf32, #tpu.memory_space<vmem>>, vector<128x128xf32>
    %cst_46 = arith.constant dense<0.000000e+00> : vector<8x128xf32>
    %71 = tpu.matmul %56, %70, %cst_46 {dimension_numbers = #tpu.dot_dimension_numbers<[1], [0], [0], [1], [0, 0, 1, 1], [], []>} : vector<8x128xf32>, vector<128x128xf32>, vector<8x128xf32> -> vector<8x128xf32>
    %72 = arith.addf %69, %71 : vector<8x128xf32>
    %73 = math.tanh %72 : vector<8x128xf32>
    %c0_47 = arith.constant 0 : index
    %c0_48 = arith.constant 0 : index
    %74 = vector.load %arg5[%c0_47, %c0_48] : memref<128x128xf32, #tpu.memory_space<vmem>>, vector<128x128xf32>
    %cst_49 = arith.constant dense<0.000000e+00> : vector<8x128xf32>
    %75 = tpu.matmul %73, %74, %cst_49 {dimension_numbers = #tpu.dot_dimension_numbers<[1], [0], [0], [1], [0, 0, 1, 1], [], []>} : vector<8x128xf32>, vector<128x128xf32>, vector<8x128xf32> -> vector<8x128xf32>
    %76 = arith.addf %63, %75 : vector<8x128xf32>
    %77 = arith.addf %76, %5 : vector<8x128xf32>
    %78 = math.tanh %77 : vector<8x128xf32>
    %c4_i32 = arith.constant 4 : i32
    %c0_50 = arith.constant 0 : index
    %c0_51 = arith.constant 0 : index
    %79 = vector.load %arg6[%c0_50, %c0_51] : memref<128x128xf32, #tpu.memory_space<vmem>>, vector<128x128xf32>
    %cst_52 = arith.constant dense<0.000000e+00> : vector<8x128xf32>
    %80 = tpu.matmul %78, %79, %cst_52 {dimension_numbers = #tpu.dot_dimension_numbers<[1], [0], [0], [1], [0, 0, 1, 1], [], []>} : vector<8x128xf32>, vector<128x128xf32>, vector<8x128xf32> -> vector<8x128xf32>
    %81 = arith.index_cast %c4_i32 : i32 to index
    %c0_53 = arith.constant 0 : index
    %c0_54 = arith.constant 0 : index
    %82 = vector.load %arg1[%81, %c0_53, %c0_54] : memref<8x8x1xf32, #tpu.memory_space<vmem>>, vector<1x8x1xf32>
    %83 = vector.shape_cast %82 : vector<1x8x1xf32> to vector<8x1xf32>
    %84 = vector.broadcast %83 : vector<8x1xf32> to vector<8x128xf32>
    %85 = arith.mulf %84, %8 : vector<8x128xf32>
    %86 = arith.addf %2, %85 : vector<8x128xf32>
    %c0_55 = arith.constant 0 : index
    %c0_56 = arith.constant 0 : index
    %87 = vector.load %arg4[%c0_55, %c0_56] : memref<128x128xf32, #tpu.memory_space<vmem>>, vector<128x128xf32>
    %cst_57 = arith.constant dense<0.000000e+00> : vector<8x128xf32>
    %88 = tpu.matmul %73, %87, %cst_57 {dimension_numbers = #tpu.dot_dimension_numbers<[1], [0], [0], [1], [0, 0, 1, 1], [], []>} : vector<8x128xf32>, vector<128x128xf32>, vector<8x128xf32> -> vector<8x128xf32>
    %89 = arith.addf %86, %88 : vector<8x128xf32>
    %90 = math.tanh %89 : vector<8x128xf32>
    %c0_58 = arith.constant 0 : index
    %c0_59 = arith.constant 0 : index
    %91 = vector.load %arg5[%c0_58, %c0_59] : memref<128x128xf32, #tpu.memory_space<vmem>>, vector<128x128xf32>
    %cst_60 = arith.constant dense<0.000000e+00> : vector<8x128xf32>
    %92 = tpu.matmul %90, %91, %cst_60 {dimension_numbers = #tpu.dot_dimension_numbers<[1], [0], [0], [1], [0, 0, 1, 1], [], []>} : vector<8x128xf32>, vector<128x128xf32>, vector<8x128xf32> -> vector<8x128xf32>
    %93 = arith.addf %80, %92 : vector<8x128xf32>
    %94 = arith.addf %93, %5 : vector<8x128xf32>
    %95 = math.tanh %94 : vector<8x128xf32>
    %c5_i32 = arith.constant 5 : i32
    %c0_61 = arith.constant 0 : index
    %c0_62 = arith.constant 0 : index
    %96 = vector.load %arg6[%c0_61, %c0_62] : memref<128x128xf32, #tpu.memory_space<vmem>>, vector<128x128xf32>
    %cst_63 = arith.constant dense<0.000000e+00> : vector<8x128xf32>
    %97 = tpu.matmul %95, %96, %cst_63 {dimension_numbers = #tpu.dot_dimension_numbers<[1], [0], [0], [1], [0, 0, 1, 1], [], []>} : vector<8x128xf32>, vector<128x128xf32>, vector<8x128xf32> -> vector<8x128xf32>
    %98 = arith.index_cast %c5_i32 : i32 to index
    %c0_64 = arith.constant 0 : index
    %c0_65 = arith.constant 0 : index
    %99 = vector.load %arg1[%98, %c0_64, %c0_65] : memref<8x8x1xf32, #tpu.memory_space<vmem>>, vector<1x8x1xf32>
    %100 = vector.shape_cast %99 : vector<1x8x1xf32> to vector<8x1xf32>
    %101 = vector.broadcast %100 : vector<8x1xf32> to vector<8x128xf32>
    %102 = arith.mulf %101, %8 : vector<8x128xf32>
    %103 = arith.addf %2, %102 : vector<8x128xf32>
    %c0_66 = arith.constant 0 : index
    %c0_67 = arith.constant 0 : index
    %104 = vector.load %arg4[%c0_66, %c0_67] : memref<128x128xf32, #tpu.memory_space<vmem>>, vector<128x128xf32>
    %cst_68 = arith.constant dense<0.000000e+00> : vector<8x128xf32>
    %105 = tpu.matmul %90, %104, %cst_68 {dimension_numbers = #tpu.dot_dimension_numbers<[1], [0], [0], [1], [0, 0, 1, 1], [], []>} : vector<8x128xf32>, vector<128x128xf32>, vector<8x128xf32> -> vector<8x128xf32>
    %106 = arith.addf %103, %105 : vector<8x128xf32>
    %107 = math.tanh %106 : vector<8x128xf32>
    %c0_69 = arith.constant 0 : index
    %c0_70 = arith.constant 0 : index
    %108 = vector.load %arg5[%c0_69, %c0_70] : memref<128x128xf32, #tpu.memory_space<vmem>>, vector<128x128xf32>
    %cst_71 = arith.constant dense<0.000000e+00> : vector<8x128xf32>
    %109 = tpu.matmul %107, %108, %cst_71 {dimension_numbers = #tpu.dot_dimension_numbers<[1], [0], [0], [1], [0, 0, 1, 1], [], []>} : vector<8x128xf32>, vector<128x128xf32>, vector<8x128xf32> -> vector<8x128xf32>
    %110 = arith.addf %97, %109 : vector<8x128xf32>
    %111 = arith.addf %110, %5 : vector<8x128xf32>
    %112 = math.tanh %111 : vector<8x128xf32>
    %c6_i32 = arith.constant 6 : i32
    %c0_72 = arith.constant 0 : index
    %c0_73 = arith.constant 0 : index
    %113 = vector.load %arg6[%c0_72, %c0_73] : memref<128x128xf32, #tpu.memory_space<vmem>>, vector<128x128xf32>
    %cst_74 = arith.constant dense<0.000000e+00> : vector<8x128xf32>
    %114 = tpu.matmul %112, %113, %cst_74 {dimension_numbers = #tpu.dot_dimension_numbers<[1], [0], [0], [1], [0, 0, 1, 1], [], []>} : vector<8x128xf32>, vector<128x128xf32>, vector<8x128xf32> -> vector<8x128xf32>
    %115 = arith.index_cast %c6_i32 : i32 to index
    %c0_75 = arith.constant 0 : index
    %c0_76 = arith.constant 0 : index
    %116 = vector.load %arg1[%115, %c0_75, %c0_76] : memref<8x8x1xf32, #tpu.memory_space<vmem>>, vector<1x8x1xf32>
    %117 = vector.shape_cast %116 : vector<1x8x1xf32> to vector<8x1xf32>
    %118 = vector.broadcast %117 : vector<8x1xf32> to vector<8x128xf32>
    %119 = arith.mulf %118, %8 : vector<8x128xf32>
    %120 = arith.addf %2, %119 : vector<8x128xf32>
    %c0_77 = arith.constant 0 : index
    %c0_78 = arith.constant 0 : index
    %121 = vector.load %arg4[%c0_77, %c0_78] : memref<128x128xf32, #tpu.memory_space<vmem>>, vector<128x128xf32>
    %cst_79 = arith.constant dense<0.000000e+00> : vector<8x128xf32>
    %122 = tpu.matmul %107, %121, %cst_79 {dimension_numbers = #tpu.dot_dimension_numbers<[1], [0], [0], [1], [0, 0, 1, 1], [], []>} : vector<8x128xf32>, vector<128x128xf32>, vector<8x128xf32> -> vector<8x128xf32>
    %123 = arith.addf %120, %122 : vector<8x128xf32>
    %124 = math.tanh %123 : vector<8x128xf32>
    %c0_80 = arith.constant 0 : index
    %c0_81 = arith.constant 0 : index
    %125 = vector.load %arg5[%c0_80, %c0_81] : memref<128x128xf32, #tpu.memory_space<vmem>>, vector<128x128xf32>
    %cst_82 = arith.constant dense<0.000000e+00> : vector<8x128xf32>
    %126 = tpu.matmul %124, %125, %cst_82 {dimension_numbers = #tpu.dot_dimension_numbers<[1], [0], [0], [1], [0, 0, 1, 1], [], []>} : vector<8x128xf32>, vector<128x128xf32>, vector<8x128xf32> -> vector<8x128xf32>
    %127 = arith.addf %114, %126 : vector<8x128xf32>
    %128 = arith.addf %127, %5 : vector<8x128xf32>
    %129 = math.tanh %128 : vector<8x128xf32>
    %c7_i32 = arith.constant 7 : i32
    %c0_83 = arith.constant 0 : index
    %c0_84 = arith.constant 0 : index
    %130 = vector.load %arg6[%c0_83, %c0_84] : memref<128x128xf32, #tpu.memory_space<vmem>>, vector<128x128xf32>
    %cst_85 = arith.constant dense<0.000000e+00> : vector<8x128xf32>
    %131 = tpu.matmul %129, %130, %cst_85 {dimension_numbers = #tpu.dot_dimension_numbers<[1], [0], [0], [1], [0, 0, 1, 1], [], []>} : vector<8x128xf32>, vector<128x128xf32>, vector<8x128xf32> -> vector<8x128xf32>
    %132 = arith.index_cast %c7_i32 : i32 to index
    %c0_86 = arith.constant 0 : index
    %c0_87 = arith.constant 0 : index
    %133 = vector.load %arg1[%132, %c0_86, %c0_87] : memref<8x8x1xf32, #tpu.memory_space<vmem>>, vector<1x8x1xf32>
    %134 = vector.shape_cast %133 : vector<1x8x1xf32> to vector<8x1xf32>
    %135 = vector.broadcast %134 : vector<8x1xf32> to vector<8x128xf32>
    %136 = arith.mulf %135, %8 : vector<8x128xf32>
    %137 = arith.addf %2, %136 : vector<8x128xf32>
    %c0_88 = arith.constant 0 : index
    %c0_89 = arith.constant 0 : index
    %138 = vector.load %arg4[%c0_88, %c0_89] : memref<128x128xf32, #tpu.memory_space<vmem>>, vector<128x128xf32>
    %cst_90 = arith.constant dense<0.000000e+00> : vector<8x128xf32>
    %139 = tpu.matmul %124, %138, %cst_90 {dimension_numbers = #tpu.dot_dimension_numbers<[1], [0], [0], [1], [0, 0, 1, 1], [], []>} : vector<8x128xf32>, vector<128x128xf32>, vector<8x128xf32> -> vector<8x128xf32>
    %140 = arith.addf %137, %139 : vector<8x128xf32>
    %141 = math.tanh %140 : vector<8x128xf32>
    %c0_91 = arith.constant 0 : index
    %c0_92 = arith.constant 0 : index
    %142 = vector.load %arg5[%c0_91, %c0_92] : memref<128x128xf32, #tpu.memory_space<vmem>>, vector<128x128xf32>
    %cst_93 = arith.constant dense<0.000000e+00> : vector<8x128xf32>
    %143 = tpu.matmul %141, %142, %cst_93 {dimension_numbers = #tpu.dot_dimension_numbers<[1], [0], [0], [1], [0, 0, 1, 1], [], []>} : vector<8x128xf32>, vector<128x128xf32>, vector<8x128xf32> -> vector<8x128xf32>
    %144 = arith.addf %131, %143 : vector<8x128xf32>
    %145 = arith.addf %144, %5 : vector<8x128xf32>
    %146 = math.tanh %145 : vector<8x128xf32>
    %c8_i32 = arith.constant 8 : i32
    %c0_94 = arith.constant 0 : index
    %c0_95 = arith.constant 0 : index
    %147 = vector.load %arg8[%c0_94, %c0_95] : memref<1x128xf32, #tpu.memory_space<vmem>>, vector<1x128xf32>
    %148 = vector.broadcast %147 : vector<1x128xf32> to vector<8x128xf32>
    %149 = arith.mulf %146, %148 : vector<8x128xf32>
    %cst_96 = arith.constant dense<0.000000e+00> : vector<8xf32>
    %150 = vector.multi_reduction <add>, %149, %cst_96 [1] : vector<8x128xf32> to vector<8xf32>
    %151 = vector.shape_cast %150 : vector<8xf32> to vector<8x1xf32>
    %c0_97 = arith.constant 0 : index
    %c0_98 = arith.constant 0 : index
    %152 = vector.load %arg9[%c0_97, %c0_98] : memref<1x1xf32, #tpu.memory_space<vmem>>, vector<1x1xf32>
    %153 = vector.broadcast %152 : vector<1x1xf32> to vector<8x1xf32>
    %154 = arith.addf %151, %153 : vector<8x1xf32>
    %c0_99 = arith.constant 0 : index
    %c0_100 = arith.constant 0 : index
    %155 = vector.load %arg10[%c0_99, %c0_100] : memref<8x1xf32, #tpu.memory_space<vmem>>, vector<8x1xf32>
    tpu.vector_store %arg10[%c0_99, %c0_100], %154 {strides = array<i32>} : memref<8x1xf32, #tpu.memory_space<vmem>>, vector<8x1xf32>,
    return
  }
  func.func @transform_0(%arg0: i32) -> (i32, i32, i32) {
    %c0_i32 = arith.constant 0 : i32
    %c0_i32_0 = arith.constant 0 : i32
    %c0_i32_1 = arith.constant 0 : i32
    return %c0_i32, %arg0, %c0_i32_0 : i32, i32, i32
  }
  func.func @transform_1(%arg0: i32) -> (i32, i32) {
    %c0_i32 = arith.constant 0 : i32
    %c0_i32_0 = arith.constant 0 : i32
    %c0_i32_1 = arith.constant 0 : i32
    return %c0_i32, %c0_i32_0 : i32, i32
  }
  func.func @transform_2(%arg0: i32) -> (i32, i32) {
    %c0_i32 = arith.constant 0 : i32
    %c0_i32_0 = arith.constant 0 : i32
    %c0_i32_1 = arith.constant 0 : i32
    return %c0_i32, %c0_i32_0 : i32, i32
  }
  func.func @transform_3(%arg0: i32) -> (i32, i32) {
    %c0_i32 = arith.constant 0 : i32
    %c0_i32_0 = arith.constant 0 : i32
    %c0_i32_1 = arith.constant 0 : i32
    return %c0_i32, %c0_i32_0 : i32, i32
  }
  func.func @transform_4(%arg0: i32) -> (i32, i32) {
    %c0_i32 = arith.constant 0 : i32
    %c0_i32_0 = arith.constant 0 : i32
    %c0_i32_1 = arith.constant 0 : i32
    return %c0_i32, %c0_i32_0 : i32, i32
  }
  func.func @transform_5(%arg0: i32) -> (i32, i32) {
    %c0_i32 = arith.constant 0 : i32
    %c0_i32_0 = arith.constant 0 : i32
    %c0_i32_1 = arith.constant 0 : i32
    return %c0_i32, %c0_i32_0 : i32, i32
  }
  func.func @transform_6(%arg0: i32) -> (i32, i32) {
    %c0_i32 = arith.constant 0 : i32
    %c0_i32_0 = arith.constant 0 : i32
    %c0_i32_1 = arith.constant 0 : i32
    return %c0_i32, %c0_i32_0 : i32, i32
  }
  func.func @transform_7(%arg0: i32) -> (i32, i32) {
    %c0_i32 = arith.constant 0 : i32
    %c0_i32_0 = arith.constant 0 : i32
    %c0_i32_1 = arith.constant 0 : i32
    return %c0_i32, %c0_i32_0 : i32, i32
  }
  func.func @transform_8(%arg0: i32) -> (i32, i32) {
    %c0_i32 = arith.constant 0 : i32
    %c0_i32_0 = arith.constant 0 : i32
    %c0_i32_1 = arith.constant 0 : i32
    return %c0_i32, %c0_i32_0 : i32, i32
  }
  func.func @transform_9(%arg0: i32) -> (i32, i32) {
    %c0_i32 = arith.constant 0 : i32
    %c0_i32_0 = arith.constant 0 : i32
    return %arg0, %c0_i32 : i32, i32
  }
}

</mosaic_0001>

<llo_original>
// kernel: tpu_custom_call.1
$region0: #{tpu_custom_call.1}
  #allocation0 [shape = 'u32[]', space=smem, size = 0x4, offset = 0x4, fixed_abs, tag = 'smem constant byte address 0x4 - core index']
  #allocation1 [shape = 'u32[144,128]{1,0:T(1,128)}', space=vmem, size = 0x12000, scoped, tag = 'internal scratch']
  #allocation2 [shape = 'f32[1,1]{1,0:T(1,128)S(1)}', space=vmem, size = 0x200, scoped, tag = 'scoped memory for tpu_custom_call.1']
  %s0 = inlined_call_operand.vmem [shape: f32[8,8,1], index: 0, kind: input, shape index: {}]
  %s1 = inlined_call_operand.vmem [shape: f32[1,128], index: 1, kind: input, shape index: {}]
  %s2 = inlined_call_operand.vmem [shape: f32[1,128], index: 2, kind: input, shape index: {}]
  %s3 = inlined_call_operand.hbm [shape: f32[128,128], index: 3, kind: input, shape index: {}]
  %s4 = inlined_call_operand.hbm [shape: f32[128,128], index: 4, kind: input, shape index: {}]
  %s5 = inlined_call_operand.hbm [shape: f32[128,128], index: 5, kind: input, shape index: {}]
  %s6 = inlined_call_operand.vmem [shape: f32[1,128], index: 6, kind: input, shape index: {}]
  %s7 = inlined_call_operand.vmem [shape: f32[1,128], index: 7, kind: input, shape index: {}]
  %s8 = inlined_call_operand.<no memory space> [shape: f32[1,1], index: 8, kind: input, shape index: {}]
  %s9 = inlined_call_operand.vmem [shape: f32[8,1], index: 9, kind: output, shape index: {}]
  %s10 = sld [smem:[#allocation0]]
  $region58: #{tpu_custom_call.1} parent=0
    _
  %s12 = ssub.s32 1, %s10
  %s13 = scalar_select 0, %s12, %s10
  %v14 = vstv %s8
  %15 = vst [vmem:[#allocation2] sm:$0x1] %v14
  $region1: #{tpu_custom_call.1} parent=0
    #allocation3 [shape = 'u8[65536]{0}', space=vmem, size = 0x10000, scoped, tag = 'input window, operand 3, single buffered']
    #allocation4 [shape = 's32[1]{0}', space=sflag, size = 0x4, scoped, tag = 'scoped memory for tpu_custom_call.1']
    #allocation5 [shape = 'u8[65536]{0}', space=vmem, size = 0x10000, scoped, tag = 'input window, operand 4, single buffered']
    #allocation6 [shape = 's32[1]{0}', space=sflag, size = 0x4, scoped, tag = 'scoped memory for tpu_custom_call.1']
    #allocation7 [shape = 'u8[65536]{0}', space=vmem, size = 0x10000, scoped, tag = 'input window, operand 5, single buffered']
    %16 = vsyncpa [#allocation4], 0
    %17 = vsyncpa [#allocation6], 0
    // Predicated region
    $region2: #{tpu_custom_call.1} parent=1 // pred_check
      _
    $region3: #{tpu_custom_call.1} parent=1 // pred_check_branch
      %19 = sbr.rel (0) target = $region5
    $region4: #{tpu_custom_call.1} parent=1 // pred_region
      _
    $region5: #{tpu_custom_call.1} parent=1 // pred_fallthru
      _
    // Predicated region
    $region6: #{tpu_custom_call.1} parent=1 // pred_check
      _
    $region7: #{tpu_custom_call.1} parent=1 // pred_check_branch
      %21 = sbr.rel (0) target = $region9
    $region8: #{tpu_custom_call.1} parent=1 // pred_region
      _
    $region9: #{tpu_custom_call.1} parent=1 // pred_fallthru
      _
    // Predicated region
    $region10: #{tpu_custom_call.1} parent=1 // pred_check
      _
    $region11: #{tpu_custom_call.1} parent=1 // pred_check_branch
      %23 = sbr.rel (0) target = $region13
    $region12: #{tpu_custom_call.1} parent=1 // pred_region
      _
    $region13: #{tpu_custom_call.1} parent=1 // pred_fallthru
      _
    // Predicated region
    $region14: #{tpu_custom_call.1} parent=1 // pred_check
      _
    $region15: #{tpu_custom_call.1} parent=1 // pred_check_branch
      %25 = sbr.rel (0) target = $region17
    $region16: #{tpu_custom_call.1} parent=1 // pred_region
      %s27 = ssub.s32 2048, 2048
      %28 = vsyncadd [#allocation4], %s27
      %s29 = sshll.u32 [#allocation3], 4
      %s30 = int_to_ptr.vmem [resolvable:$true] %s29
      %35 = dma.hbm_to_vmem [thread:$0]  %s3, 2048, %s30, [#allocation4], 128, 128, 8
    $region17: #{tpu_custom_call.1} parent=1 // pred_fallthru
      _
    // Predicated region
    $region18: #{tpu_custom_call.1} parent=1 // pred_check
      _
    $region19: #{tpu_custom_call.1} parent=1 // pred_check_branch
      %37 = sbr.rel (0) target = $region21
    $region20: #{tpu_custom_call.1} parent=1 // pred_region
      %s39 = ssub.s32 2048, 2048
      %40 = vsyncadd [#allocation6], %s39
      %s41 = sshll.u32 [#allocation5], 4
      %s42 = int_to_ptr.vmem [resolvable:$true] %s41
      %47 = dma.hbm_to_vmem [thread:$0]  %s4, 2048, %s42, [#allocation6], 128, 128, 8
    $region21: #{tpu_custom_call.1} parent=1 // pred_fallthru
      _
    // Predicated region
    $region22: #{tpu_custom_call.1} parent=1 // pred_check
      _
    $region23: #{tpu_custom_call.1} parent=1 // pred_check_branch
      %49 = sbr.rel (0) target = $region25
    $region24: #{tpu_custom_call.1} parent=1 // pred_region
      %s51 = ssub.s32 2048, 2048
      %52 = vsyncadd [#allocation6], %s51
      %s53 = sshll.u32 [#allocation7], 4
      %s54 = int_to_ptr.vmem [resolvable:$true] %s53
      %59 = dma.hbm_to_vmem [thread:$0]  %s5, 2048, %s54, [#allocation6], 128, 128, 8
    $region25: #{tpu_custom_call.1} parent=1 // pred_fallthru
      _
    // Predicated region
    $region26: #{tpu_custom_call.1} parent=1 // pred_check
      _
    $region27: #{tpu_custom_call.1} parent=1 // pred_check_branch
      %61 = sbr.rel (0) target = $region29
    $region28: #{tpu_custom_call.1} parent=1 // pred_region
      _
    $region29: #{tpu_custom_call.1} parent=1 // pred_fallthru
      _
    // Predicated region
    $region30: #{tpu_custom_call.1} parent=1 // pred_check
      _
    $region31: #{tpu_custom_call.1} parent=1 // pred_check_branch
      %63 = sbr.rel (0) target = $region33
    $region32: #{tpu_custom_call.1} parent=1 // pred_region
      _
    $region33: #{tpu_custom_call.1} parent=1 // pred_fallthru
      _
    // Predicated region
    $region34: #{tpu_custom_call.1} parent=1 // pred_check
      _
    $region35: #{tpu_custom_call.1} parent=1 // pred_check_branch
      %65 = sbr.rel (0) target = $region37
    $region36: #{tpu_custom_call.1} parent=1 // pred_region
      _
    $region37: #{tpu_custom_call.1} parent=1 // pred_fallthru
      _
    // Predicated region
    $region38: #{tpu_custom_call.1} parent=1 // pred_check
      _
    $region39: #{tpu_custom_call.1} parent=1 // pred_check_branch
      %67 = sbr.rel (0) target = $region41
    $region40: #{tpu_custom_call.1} parent=1 // pred_region
      %68 = dma.done [#allocation4], 2048
    $region41: #{tpu_custom_call.1} parent=1 // pred_fallthru
      _
    // Predicated region
    $region42: #{tpu_custom_call.1} parent=1 // pred_check
      _
    $region43: #{tpu_custom_call.1} parent=1 // pred_check_branch
      %70 = sbr.rel (0) target = $region45
    $region44: #{tpu_custom_call.1} parent=1 // pred_region
      %71 = dma.done [#allocation6], 2048
    $region45: #{tpu_custom_call.1} parent=1 // pred_fallthru
      _
    // Predicated region
    $region46: #{tpu_custom_call.1} parent=1 // pred_check
      _
    $region47: #{tpu_custom_call.1} parent=1 // pred_check_branch
      %73 = sbr.rel (0) target = $region49
    $region48: #{tpu_custom_call.1} parent=1 // pred_region
      %74 = dma.done [#allocation6], 2048
    $region49: #{tpu_custom_call.1} parent=1 // pred_fallthru
      _
    %v75 = vld [vmem:[%s2] sm:$0x1]
    %v77 = vlaneseq
    %v78 = vshrl.u32 %v77, 7
    %v79 = vsub.s32 0, %v78
    %v80 = vrot.slane %v75, %v79
    %v82 = vld [vmem:[%s6] sm:$0x1]
    %v84 = vlaneseq
    %v85 = vshrl.u32 %v84, 7
    %v86 = vsub.s32 0, %v85
    %v87 = vrot.slane %v82, %v86
    %v89 = vld [vmem:[%s1] sm:$0x1]
    %v91 = vlaneseq
    %v92 = vshrl.u32 %v91, 7
    %v93 = vsub.s32 0, %v92
    %v94 = vrot.slane %v89, %v93
    %v96 = vld [vmem:[#allocation7] sm:$0xff]
    %v97 = vld [vmem:[#allocation7 + $0x8] sm:$0xff]
    %v98 = vld [vmem:[#allocation7 + $0x10] sm:$0xff]
    %v99 = vld [vmem:[#allocation7 + $0x18] sm:$0xff]
    %v100 = vld [vmem:[#allocation7 + $0x20] sm:$0xff]
    %v101 = vld [vmem:[#allocation7 + $0x28] sm:$0xff]
    %v102 = vld [vmem:[#allocation7 + $0x30] sm:$0xff]
    %v103 = vld [vmem:[#allocation7 + $0x38] sm:$0xff]
    %v104 = vld [vmem:[#allocation7 + $0x40] sm:$0xff]
    %v105 = vld [vmem:[#allocation7 + $0x48] sm:$0xff]
    %v106 = vld [vmem:[#allocation7 + $0x50] sm:$0xff]
    %v107 = vld [vmem:[#allocation7 + $0x58] sm:$0xff]
    %v108 = vld [vmem:[#allocation7 + $0x60] sm:$0xff]
    %v109 = vld [vmem:[#allocation7 + $0x68] sm:$0xff]
    %v110 = vld [vmem:[#allocation7 + $0x70] sm:$0xff]
    %v111 = vld [vmem:[#allocation7 + $0x78] sm:$0xff]
    %v112 = vld [vmem:[%s0] sm:$0xff]
    %114 = vset.pattern.permute.xlu0 0
    %115 = vperm.xlu0 %114, %v112
    %v116 = vpop.permute.xlu0 %115
    %v118 = vmul.f32 %v116, %v94
    %v119 = vadd.f32 %v80, %v118
    %v120 = vld [vmem:[#allocation3] sm:$0xff]
    %v121 = vld [vmem:[#allocation3 + $0x8] sm:$0xff]
    %v122 = vld [vmem:[#allocation3 + $0x10] sm:$0xff]
    %v123 = vld [vmem:[#allocation3 + $0x18] sm:$0xff]
    %v124 = vld [vmem:[#allocation3 + $0x20] sm:$0xff]
    %v125 = vld [vmem:[#allocation3 + $0x28] sm:$0xff]
    %v126 = vld [vmem:[#allocation3 + $0x30] sm:$0xff]
    %v127 = vld [vmem:[#allocation3 + $0x38] sm:$0xff]
    %v128 = vld [vmem:[#allocation3 + $0x40] sm:$0xff]
    %v129 = vld [vmem:[#allocation3 + $0x48] sm:$0xff]
    %v130 = vld [vmem:[#allocation3 + $0x50] sm:$0xff]
    %v131 = vld [vmem:[#allocation3 + $0x58] sm:$0xff]
    %v132 = vld [vmem:[#allocation3 + $0x60] sm:$0xff]
    %v133 = vld [vmem:[#allocation3 + $0x68] sm:$0xff]
    %v134 = vld [vmem:[#allocation3 + $0x70] sm:$0xff]
    %v135 = vld [vmem:[#allocation3 + $0x78] sm:$0xff]
    %136 = vmatprep.subr.mxu0 0.0
    %137 = vmatpush1.msra.mxu0 %v135
    %138 = vmatprep.subr.mxu0 0.0
    %139 = vmatpush1.msra.mxu0 %v134
    %140 = vmatprep.subr.mxu0 0.0
    %141 = vmatpush1.msra.mxu0 %v133
    %142 = vmatprep.subr.mxu0 0.0
    %143 = vmatpush1.msra.mxu0 %v132
    %144 = vmatprep.subr.mxu0 0.0
    %145 = vmatpush1.msra.mxu0 %v131
    %146 = vmatprep.subr.mxu0 0.0
    %147 = vmatpush1.msra.mxu0 %v130
    %148 = vmatprep.subr.mxu0 0.0
    %149 = vmatpush1.msra.mxu0 %v129
    %150 = vmatprep.subr.mxu0 0.0
    %151 = vmatpush1.msra.mxu0 %v128
    %152 = vmatprep.subr.mxu0 0.0
    %153 = vmatpush1.msra.mxu0 %v127
    %154 = vmatprep.subr.mxu0 0.0
    %155 = vmatpush1.msra.mxu0 %v126
    %156 = vmatprep.subr.mxu0 0.0
    %157 = vmatpush1.msra.mxu0 %v125
    %158 = vmatprep.subr.mxu0 0.0
    %159 = vmatpush1.msra.mxu0 %v124
    %160 = vmatprep.subr.mxu0 0.0
    %161 = vmatpush1.msra.mxu0 %v123
    %162 = vmatprep.subr.mxu0 0.0
    %163 = vmatpush1.msra.mxu0 %v122
    %164 = vmatprep.subr.mxu0 0.0
    %165 = vmatpush1.msra.mxu0 %v121
    %166 = vmatprep.subr.mxu0 0.0
    %167 = vmatpush1.msra.mxu0 %v120
    %168 = vmatprep.subr.mxu0 0.0
    %169 = vmatpush2.msra.mxu0 0.0
    %170 = vmatprep.subr.mxu0 0.0
    %171 = vmatpush2.msra.mxu0 0.0
    %172 = vmatprep.subr.mxu0 0.0
    %173 = vmatpush2.msra.mxu0 0.0
    %174 = vmatprep.subr.mxu0 0.0
    %175 = vmatpush2.msra.mxu0 0.0
    %176 = vmatprep.subr.mxu0 0.0
    %177 = vmatpush2.msra.mxu0 0.0
    %178 = vmatprep.subr.mxu0 0.0
    %179 = vmatpush2.msra.mxu0 0.0
    %180 = vmatprep.subr.mxu0 0.0
    %181 = vmatpush2.msra.mxu0 0.0
    %182 = vmatprep.subr.mxu0 0.0
    %183 = vmatpush2.msra.mxu0 0.0
    %184 = vmatprep.subr.mxu0 0.0
    %185 = vmatpush2.msra.mxu0 0.0
    %186 = vmatprep.subr.mxu0 0.0
    %187 = vmatpush2.msra.mxu0 0.0
    %188 = vmatprep.subr.mxu0 0.0
    %189 = vmatpush2.msra.mxu0 0.0
    %190 = vmatprep.subr.mxu0 0.0
    %191 = vmatpush2.msra.mxu0 0.0
    %192 = vmatprep.subr.mxu0 0.0
    %193 = vmatpush2.msra.mxu0 0.0
    %194 = vmatprep.subr.mxu0 0.0
    %195 = vmatpush2.msra.mxu0 0.0
    %196 = vmatprep.subr.mxu0 0.0
    %197 = vmatpush2.msra.mxu0 0.0
    %198 = vmatprep.subr.mxu0 0.0
    %199 = vmatpush2.msra.mxu0 0.0
    %200 = vmatprep.mubr.f32.mxu0 0.0
    %201 = vmatmul.mubr.f32.gmra.mxu0 0.0
    %v202 = vpop.f32.mrf.mxu0
    %v203 = vadd.f32 0.0, %v202
    %v204 = vpop.f32.mrf.mxu0
    %205 = vdwg.mxu0
    %v206 = vadd.f32 %v119, %v203
    %v207 = vtanh.pop %v206
    %v208 = vld [vmem:[#allocation5] sm:$0xff]
    %v209 = vld [vmem:[#allocation5 + $0x8] sm:$0xff]
    %v210 = vld [vmem:[#allocation5 + $0x10] sm:$0xff]
    %v211 = vld [vmem:[#allocation5 + $0x18] sm:$0xff]
    %v212 = vld [vmem:[#allocation5 + $0x20] sm:$0xff]
    %v213 = vld [vmem:[#allocation5 + $0x28] sm:$0xff]
    %v214 = vld [vmem:[#allocation5 + $0x30] sm:$0xff]
    %v215 = vld [vmem:[#allocation5 + $0x38] sm:$0xff]
    %v216 = vld [vmem:[#allocation5 + $0x40] sm:$0xff]
    %v217 = vld [vmem:[#allocation5 + $0x48] sm:$0xff]
    %v218 = vld [vmem:[#allocation5 + $0x50] sm:$0xff]
    %v219 = vld [vmem:[#allocation5 + $0x58] sm:$0xff]
    %v220 = vld [vmem:[#allocation5 + $0x60] sm:$0xff]
    %v221 = vld [vmem:[#allocation5 + $0x68] sm:$0xff]
    %v222 = vld [vmem:[#allocation5 + $0x70] sm:$0xff]
    %v223 = vld [vmem:[#allocation5 + $0x78] sm:$0xff]
    %224 = vmatprep.subr.mxu0 0.0
    %225 = vmatpush1.msra.mxu0 %v223
    %226 = vmatprep.subr.mxu0 0.0
    %227 = vmatpush1.msra.mxu0 %v222
    %228 = vmatprep.subr.mxu0 0.0
    %229 = vmatpush1.msra.mxu0 %v221
    %230 = vmatprep.subr.mxu0 0.0
    %231 = vmatpush1.msra.mxu0 %v220
    %232 = vmatprep.subr.mxu0 0.0
    %233 = vmatpush1.msra.mxu0 %v219
    %234 = vmatprep.subr.mxu0 0.0
    %235 = vmatpush1.msra.mxu0 %v218
    %236 = vmatprep.subr.mxu0 0.0
    %237 = vmatpush1.msra.mxu0 %v217
    %238 = vmatprep.subr.mxu0 0.0
    %239 = vmatpush1.msra.mxu0 %v216
    %240 = vmatprep.subr.mxu0 0.0
    %241 = vmatpush1.msra.mxu0 %v215
    %242 = vmatprep.subr.mxu0 0.0
    %243 = vmatpush1.msra.mxu0 %v214
    %244 = vmatprep.subr.mxu0 0.0
    %245 = vmatpush1.msra.mxu0 %v213
    %246 = vmatprep.subr.mxu0 0.0
    %247 = vmatpush1.msra.mxu0 %v212
    %248 = vmatprep.subr.mxu0 0.0
    %249 = vmatpush1.msra.mxu0 %v211
    %250 = vmatprep.subr.mxu0 0.0
    %251 = vmatpush1.msra.mxu0 %v210
    %252 = vmatprep.subr.mxu0 0.0
    %253 = vmatpush1.msra.mxu0 %v209
    %254 = vmatprep.subr.mxu0 0.0
    %255 = vmatpush1.msra.mxu0 %v208
    %256 = vmatprep.subr.mxu0 0.0
    %257 = vmatpush2.msra.mxu0 0.0
    %258 = vmatprep.subr.mxu0 0.0
    %259 = vmatpush2.msra.mxu0 0.0
    %260 = vmatprep.subr.mxu0 0.0
    %261 = vmatpush2.msra.mxu0 0.0
    %262 = vmatprep.subr.mxu0 0.0
    %263 = vmatpush2.msra.mxu0 0.0
    %264 = vmatprep.subr.mxu0 0.0
    %265 = vmatpush2.msra.mxu0 0.0
    %266 = vmatprep.subr.mxu0 0.0
    %267 = vmatpush2.msra.mxu0 0.0
    %268 = vmatprep.subr.mxu0 0.0
    %269 = vmatpush2.msra.mxu0 0.0
    %270 = vmatprep.subr.mxu0 0.0
    %271 = vmatpush2.msra.mxu0 0.0
    %272 = vmatprep.subr.mxu0 0.0
    %273 = vmatpush2.msra.mxu0 0.0
    %274 = vmatprep.subr.mxu0 0.0
    %275 = vmatpush2.msra.mxu0 0.0
    %276 = vmatprep.subr.mxu0 0.0
    %277 = vmatpush2.msra.mxu0 0.0
    %278 = vmatprep.subr.mxu0 0.0
    %279 = vmatpush2.msra.mxu0 0.0
    %280 = vmatprep.subr.mxu0 0.0
    %281 = vmatpush2.msra.mxu0 0.0
    %282 = vmatprep.subr.mxu0 0.0
    %283 = vmatpush2.msra.mxu0 0.0
    %284 = vmatprep.subr.mxu0 0.0
    %285 = vmatpush2.msra.mxu0 0.0
    %286 = vmatprep.subr.mxu0 0.0
    %287 = vmatpush2.msra.mxu0 0.0
    %288 = vmatprep.mubr.f32.mxu0 0.0
    %289 = vmatmul.mubr.f32.gmra.mxu0 %v207
    %v290 = vpop.f32.mrf.mxu0
    %v291 = vadd.f32 0.0, %v290
    %v292 = vpop.f32.mrf.mxu0
    %293 = vdwg.mxu0
    %294 = vmatprep.subr.mxu0 0.0
    %295 = vmatpush1.msra.mxu0 %v111
    %296 = vmatprep.subr.mxu0 0.0
    %297 = vmatpush1.msra.mxu0 %v110
    %298 = vmatprep.subr.mxu0 0.0
    %299 = vmatpush1.msra.mxu0 %v109
    %300 = vmatprep.subr.mxu0 0.0
    %301 = vmatpush1.msra.mxu0 %v108
    %302 = vmatprep.subr.mxu0 0.0
    %303 = vmatpush1.msra.mxu0 %v107
    %304 = vmatprep.subr.mxu0 0.0
    %305 = vmatpush1.msra.mxu0 %v106
    %306 = vmatprep.subr.mxu0 0.0
    %307 = vmatpush1.msra.mxu0 %v105
    %308 = vmatprep.subr.mxu0 0.0
    %309 = vmatpush1.msra.mxu0 %v104
    %310 = vmatprep.subr.mxu0 0.0
    %311 = vmatpush1.msra.mxu0 %v103
    %312 = vmatprep.subr.mxu0 0.0
    %313 = vmatpush1.msra.mxu0 %v102
    %314 = vmatprep.subr.mxu0 0.0
    %315 = vmatpush1.msra.mxu0 %v101
    %316 = vmatprep.subr.mxu0 0.0
    %317 = vmatpush1.msra.mxu0 %v100
    %318 = vmatprep.subr.mxu0 0.0
    %319 = vmatpush1.msra.mxu0 %v99
    %320 = vmatprep.subr.mxu0 0.0
    %321 = vmatpush1.msra.mxu0 %v98
    %322 = vmatprep.subr.mxu0 0.0
    %323 = vmatpush1.msra.mxu0 %v97
    %324 = vmatprep.subr.mxu0 0.0
    %325 = vmatpush1.msra.mxu0 %v96
    %326 = vmatprep.subr.mxu0 0.0
    %327 = vmatpush2.msra.mxu0 0.0
    %328 = vmatprep.subr.mxu0 0.0
    %329 = vmatpush2.msra.mxu0 0.0
    %330 = vmatprep.subr.mxu0 0.0
    %331 = vmatpush2.msra.mxu0 0.0
    %332 = vmatprep.subr.mxu0 0.0
    %333 = vmatpush2.msra.mxu0 0.0
    %334 = vmatprep.subr.mxu0 0.0
    %335 = vmatpush2.msra.mxu0 0.0
    %336 = vmatprep.subr.mxu0 0.0
    %337 = vmatpush2.msra.mxu0 0.0
    %338 = vmatprep.subr.mxu0 0.0
    %339 = vmatpush2.msra.mxu0 0.0
    %340 = vmatprep.subr.mxu0 0.0
    %341 = vmatpush2.msra.mxu0 0.0
    %342 = vmatprep.subr.mxu0 0.0
    %343 = vmatpush2.msra.mxu0 0.0
    %344 = vmatprep.subr.mxu0 0.0
    %345 = vmatpush2.msra.mxu0 0.0
    %346 = vmatprep.subr.mxu0 0.0
    %347 = vmatpush2.msra.mxu0 0.0
    %348 = vmatprep.subr.mxu0 0.0
    %349 = vmatpush2.msra.mxu0 0.0
    %350 = vmatprep.subr.mxu0 0.0
    %351 = vmatpush2.msra.mxu0 0.0
    %352 = vmatprep.subr.mxu0 0.0
    %353 = vmatpush2.msra.mxu0 0.0
    %354 = vmatprep.subr.mxu0 0.0
    %355 = vmatpush2.msra.mxu0 0.0
    %356 = vmatprep.subr.mxu0 0.0
    %357 = vmatpush2.msra.mxu0 0.0
    %358 = vmatprep.mubr.f32.mxu0 0.0
    %359 = vmatmul.mubr.f32.gmra.mxu0 0.0
    %v360 = vpop.f32.mrf.mxu0
    %v361 = vadd.f32 %v291, %v360
    %v362 = vpop.f32.mrf.mxu0
    %363 = vdwg.mxu0
    %v364 = vadd.f32 %v361, %v87
    %v365 = vtanh.pop %v364
    %s366 = scalar_lea.vmem %s0, 8
    %v367 = vld [vmem:[%s366] sm:$0xff]
    %369 = vset.pattern.permute.xlu0 0
    %370 = vperm.xlu0 %369, %v367
    %v371 = vpop.permute.xlu0 %370
    %v373 = vmul.f32 %v371, %v94
    %v374 = vadd.f32 %v80, %v373
    %375 = vmatprep.subr.mxu0 0.0
    %376 = vmatpush1.msra.mxu0 %v135
    %377 = vmatprep.subr.mxu0 0.0
    %378 = vmatpush1.msra.mxu0 %v134
    %379 = vmatprep.subr.mxu0 0.0
    %380 = vmatpush1.msra.mxu0 %v133
    %381 = vmatprep.subr.mxu0 0.0
    %382 = vmatpush1.msra.mxu0 %v132
    %383 = vmatprep.subr.mxu0 0.0
    %384 = vmatpush1.msra.mxu0 %v131
    %385 = vmatprep.subr.mxu0 0.0
    %386 = vmatpush1.msra.mxu0 %v130
    %387 = vmatprep.subr.mxu0 0.0
    %388 = vmatpush1.msra.mxu0 %v129
    %389 = vmatprep.subr.mxu0 0.0
    %390 = vmatpush1.msra.mxu0 %v128
    %391 = vmatprep.subr.mxu0 0.0
    %392 = vmatpush1.msra.mxu0 %v127
    %393 = vmatprep.subr.mxu0 0.0
    %394 = vmatpush1.msra.mxu0 %v126
    %395 = vmatprep.subr.mxu0 0.0
    %396 = vmatpush1.msra.mxu0 %v125
    %397 = vmatprep.subr.mxu0 0.0
    %398 = vmatpush1.msra.mxu0 %v124
    %399 = vmatprep.subr.mxu0 0.0
    %400 = vmatpush1.msra.mxu0 %v123
    %401 = vmatprep.subr.mxu0 0.0
    %402 = vmatpush1.msra.mxu0 %v122
    %403 = vmatprep.subr.mxu0 0.0
    %404 = vmatpush1.msra.mxu0 %v121
    %405 = vmatprep.subr.mxu0 0.0
    %406 = vmatpush1.msra.mxu0 %v120
    %407 = vmatprep.subr.mxu0 0.0
    %408 = vmatpush2.msra.mxu0 0.0
    %409 = vmatprep.subr.mxu0 0.0
    %410 = vmatpush2.msra.mxu0 0.0
    %411 = vmatprep.subr.mxu0 0.0
    %412 = vmatpush2.msra.mxu0 0.0
    %413 = vmatprep.subr.mxu0 0.0
    %414 = vmatpush2.msra.mxu0 0.0
    %415 = vmatprep.subr.mxu0 0.0
    %416 = vmatpush2.msra.mxu0 0.0
    %417 = vmatprep.subr.mxu0 0.0
    %418 = vmatpush2.msra.mxu0 0.0
    %419 = vmatprep.subr.mxu0 0.0
    %420 = vmatpush2.msra.mxu0 0.0
    %421 = vmatprep.subr.mxu0 0.0
    %422 = vmatpush2.msra.mxu0 0.0
    %423 = vmatprep.subr.mxu0 0.0
    %424 = vmatpush2.msra.mxu0 0.0
    %425 = vmatprep.subr.mxu0 0.0
    %426 = vmatpush2.msra.mxu0 0.0
    %427 = vmatprep.subr.mxu0 0.0
    %428 = vmatpush2.msra.mxu0 0.0
    %429 = vmatprep.subr.mxu0 0.0
    %430 = vmatpush2.msra.mxu0 0.0
    %431 = vmatprep.subr.mxu0 0.0
    %432 = vmatpush2.msra.mxu0 0.0
    %433 = vmatprep.subr.mxu0 0.0
    %434 = vmatpush2.msra.mxu0 0.0
    %435 = vmatprep.subr.mxu0 0.0
    %436 = vmatpush2.msra.mxu0 0.0
    %437 = vmatprep.subr.mxu0 0.0
    %438 = vmatpush2.msra.mxu0 0.0
    %439 = vmatprep.mubr.f32.mxu0 0.0
    %440 = vmatmul.mubr.f32.gmra.mxu0 %v207
    %v441 = vpop.f32.mrf.mxu0
    %v442 = vadd.f32 0.0, %v441
    %v443 = vpop.f32.mrf.mxu0
    %444 = vdwg.mxu0
    %v445 = vadd.f32 %v374, %v442
    %v446 = vtanh.pop %v445
    %447 = vmatprep.subr.mxu0 0.0
    %448 = vmatpush1.msra.mxu0 %v223
    %449 = vmatprep.subr.mxu0 0.0
    %450 = vmatpush1.msra.mxu0 %v222
    %451 = vmatprep.subr.mxu0 0.0
    %452 = vmatpush1.msra.mxu0 %v221
    %453 = vmatprep.subr.mxu0 0.0
    %454 = vmatpush1.msra.mxu0 %v220
    %455 = vmatprep.subr.mxu0 0.0
    %456 = vmatpush1.msra.mxu0 %v219
    %457 = vmatprep.subr.mxu0 0.0
    %458 = vmatpush1.msra.mxu0 %v218
    %459 = vmatprep.subr.mxu0 0.0
    %460 = vmatpush1.msra.mxu0 %v217
    %461 = vmatprep.subr.mxu0 0.0
    %462 = vmatpush1.msra.mxu0 %v216
    %463 = vmatprep.subr.mxu0 0.0
    %464 = vmatpush1.msra.mxu0 %v215
    %465 = vmatprep.subr.mxu0 0.0
    %466 = vmatpush1.msra.mxu0 %v214
    %467 = vmatprep.subr.mxu0 0.0
    %468 = vmatpush1.msra.mxu0 %v213
    %469 = vmatprep.subr.mxu0 0.0
    %470 = vmatpush1.msra.mxu0 %v212
    %471 = vmatprep.subr.mxu0 0.0
    %472 = vmatpush1.msra.mxu0 %v211
    %473 = vmatprep.subr.mxu0 0.0
    %474 = vmatpush1.msra.mxu0 %v210
    %475 = vmatprep.subr.mxu0 0.0
    %476 = vmatpush1.msra.mxu0 %v209
    %477 = vmatprep.subr.mxu0 0.0
    %478 = vmatpush1.msra.mxu0 %v208
    %479 = vmatprep.subr.mxu0 0.0
    %480 = vmatpush2.msra.mxu0 0.0
    %481 = vmatprep.subr.mxu0 0.0
    %482 = vmatpush2.msra.mxu0 0.0
    %483 = vmatprep.subr.mxu0 0.0
    %484 = vmatpush2.msra.mxu0 0.0
    %485 = vmatprep.subr.mxu0 0.0
    %486 = vmatpush2.msra.mxu0 0.0
    %487 = vmatprep.subr.mxu0 0.0
    %488 = vmatpush2.msra.mxu0 0.0
    %489 = vmatprep.subr.mxu0 0.0
    %490 = vmatpush2.msra.mxu0 0.0
    %491 = vmatprep.subr.mxu0 0.0
    %492 = vmatpush2.msra.mxu0 0.0
    %493 = vmatprep.subr.mxu0 0.0
    %494 = vmatpush2.msra.mxu0 0.0
    %495 = vmatprep.subr.mxu0 0.0
    %496 = vmatpush2.msra.mxu0 0.0
    %497 = vmatprep.subr.mxu0 0.0
    %498 = vmatpush2.msra.mxu0 0.0
    %499 = vmatprep.subr.mxu0 0.0
    %500 = vmatpush2.msra.mxu0 0.0
    %501 = vmatprep.subr.mxu0 0.0
    %502 = vmatpush2.msra.mxu0 0.0
    %503 = vmatprep.subr.mxu0 0.0
    %504 = vmatpush2.msra.mxu0 0.0
    %505 = vmatprep.subr.mxu0 0.0
    %506 = vmatpush2.msra.mxu0 0.0
    %507 = vmatprep.subr.mxu0 0.0
    %508 = vmatpush2.msra.mxu0 0.0
    %509 = vmatprep.subr.mxu0 0.0
    %510 = vmatpush2.msra.mxu0 0.0
    %511 = vmatprep.mubr.f32.mxu0 0.0
    %512 = vmatmul.mubr.f32.gmra.mxu0 %v446
    %v513 = vpop.f32.mrf.mxu0
    %v514 = vadd.f32 0.0, %v513
    %v515 = vpop.f32.mrf.mxu0
    %516 = vdwg.mxu0
    %517 = vmatprep.subr.mxu0 0.0
    %518 = vmatpush1.msra.mxu0 %v111
    %519 = vmatprep.subr.mxu0 0.0
    %520 = vmatpush1.msra.mxu0 %v110
    %521 = vmatprep.subr.mxu0 0.0
    %522 = vmatpush1.msra.mxu0 %v109
    %523 = vmatprep.subr.mxu0 0.0
    %524 = vmatpush1.msra.mxu0 %v108
    %525 = vmatprep.subr.mxu0 0.0
    %526 = vmatpush1.msra.mxu0 %v107
    %527 = vmatprep.subr.mxu0 0.0
    %528 = vmatpush1.msra.mxu0 %v106
    %529 = vmatprep.subr.mxu0 0.0
    %530 = vmatpush1.msra.mxu0 %v105
    %531 = vmatprep.subr.mxu0 0.0
    %532 = vmatpush1.msra.mxu0 %v104
    %533 = vmatprep.subr.mxu0 0.0
    %534 = vmatpush1.msra.mxu0 %v103
    %535 = vmatprep.subr.mxu0 0.0
    %536 = vmatpush1.msra.mxu0 %v102
    %537 = vmatprep.subr.mxu0 0.0
    %538 = vmatpush1.msra.mxu0 %v101
    %539 = vmatprep.subr.mxu0 0.0
    %540 = vmatpush1.msra.mxu0 %v100
    %541 = vmatprep.subr.mxu0 0.0
    %542 = vmatpush1.msra.mxu0 %v99
    %543 = vmatprep.subr.mxu0 0.0
    %544 = vmatpush1.msra.mxu0 %v98
    %545 = vmatprep.subr.mxu0 0.0
    %546 = vmatpush1.msra.mxu0 %v97
    %547 = vmatprep.subr.mxu0 0.0
    %548 = vmatpush1.msra.mxu0 %v96
    %549 = vmatprep.subr.mxu0 0.0
    %550 = vmatpush2.msra.mxu0 0.0
    %551 = vmatprep.subr.mxu0 0.0
    %552 = vmatpush2.msra.mxu0 0.0
    %553 = vmatprep.subr.mxu0 0.0
    %554 = vmatpush2.msra.mxu0 0.0
    %555 = vmatprep.subr.mxu0 0.0
    %556 = vmatpush2.msra.mxu0 0.0
    %557 = vmatprep.subr.mxu0 0.0
    %558 = vmatpush2.msra.mxu0 0.0
    %559 = vmatprep.subr.mxu0 0.0
    %560 = vmatpush2.msra.mxu0 0.0
    %561 = vmatprep.subr.mxu0 0.0
    %562 = vmatpush2.msra.mxu0 0.0
    %563 = vmatprep.subr.mxu0 0.0
    %564 = vmatpush2.msra.mxu0 0.0
    %565 = vmatprep.subr.mxu0 0.0
    %566 = vmatpush2.msra.mxu0 0.0
    %567 = vmatprep.subr.mxu0 0.0
    %568 = vmatpush2.msra.mxu0 0.0
    %569 = vmatprep.subr.mxu0 0.0
    %570 = vmatpush2.msra.mxu0 0.0
    %571 = vmatprep.subr.mxu0 0.0
    %572 = vmatpush2.msra.mxu0 0.0
    %573 = vmatprep.subr.mxu0 0.0
    %574 = vmatpush2.msra.mxu0 0.0
    %575 = vmatprep.subr.mxu0 0.0
    %576 = vmatpush2.msra.mxu0 0.0
    %577 = vmatprep.subr.mxu0 0.0
    %578 = vmatpush2.msra.mxu0 0.0
    %579 = vmatprep.subr.mxu0 0.0
    %580 = vmatpush2.msra.mxu0 0.0
    %581 = vmatprep.mubr.f32.mxu0 0.0
    %582 = vmatmul.mubr.f32.gmra.mxu0 %v365
    %v583 = vpop.f32.mrf.mxu0
    %v584 = vadd.f32 %v514, %v583
    %v585 = vpop.f32.mrf.mxu0
    %586 = vdwg.mxu0
    %v587 = vadd.f32 %v584, %v87
    %v588 = vtanh.pop %v587
    %s589 = scalar_lea.vmem %s0, 16
    %v590 = vld [vmem:[%s589] sm:$0xff]
    %592 = vset.pattern.permute.xlu0 0
    %593 = vperm.xlu0 %592, %v590
    %v594 = vpop.permute.xlu0 %593
    %v596 = vmul.f32 %v594, %v94
    %v597 = vadd.f32 %v80, %v596
    %598 = vmatprep.subr.mxu0 0.0
    %599 = vmatpush1.msra.mxu0 %v135
    %600 = vmatprep.subr.mxu0 0.0
    %601 = vmatpush1.msra.mxu0 %v134
    %602 = vmatprep.subr.mxu0 0.0
    %603 = vmatpush1.msra.mxu0 %v133
    %604 = vmatprep.subr.mxu0 0.0
    %605 = vmatpush1.msra.mxu0 %v132
    %606 = vmatprep.subr.mxu0 0.0
    %607 = vmatpush1.msra.mxu0 %v131
    %608 = vmatprep.subr.mxu0 0.0
    %609 = vmatpush1.msra.mxu0 %v130
    %610 = vmatprep.subr.mxu0 0.0
    %611 = vmatpush1.msra.mxu0 %v129
    %612 = vmatprep.subr.mxu0 0.0
    %613 = vmatpush1.msra.mxu0 %v128
    %614 = vmatprep.subr.mxu0 0.0
    %615 = vmatpush1.msra.mxu0 %v127
    %616 = vmatprep.subr.mxu0 0.0
    %617 = vmatpush1.msra.mxu0 %v126
    %618 = vmatprep.subr.mxu0 0.0
    %619 = vmatpush1.msra.mxu0 %v125
    %620 = vmatprep.subr.mxu0 0.0
    %621 = vmatpush1.msra.mxu0 %v124
    %622 = vmatprep.subr.mxu0 0.0
    %623 = vmatpush1.msra.mxu0 %v123
    %624 = vmatprep.subr.mxu0 0.0
    %625 = vmatpush1.msra.mxu0 %v122
    %626 = vmatprep.subr.mxu0 0.0
    %627 = vmatpush1.msra.mxu0 %v121
    %628 = vmatprep.subr.mxu0 0.0
    %629 = vmatpush1.msra.mxu0 %v120
    %630 = vmatprep.subr.mxu0 0.0
    %631 = vmatpush2.msra.mxu0 0.0
    %632 = vmatprep.subr.mxu0 0.0
    %633 = vmatpush2.msra.mxu0 0.0
    %634 = vmatprep.subr.mxu0 0.0
    %635 = vmatpush2.msra.mxu0 0.0
    %636 = vmatprep.subr.mxu0 0.0
    %637 = vmatpush2.msra.mxu0 0.0
    %638 = vmatprep.subr.mxu0 0.0
    %639 = vmatpush2.msra.mxu0 0.0
    %640 = vmatprep.subr.mxu0 0.0
    %641 = vmatpush2.msra.mxu0 0.0
    %642 = vmatprep.subr.mxu0 0.0
    %643 = vmatpush2.msra.mxu0 0.0
    %644 = vmatprep.subr.mxu0 0.0
    %645 = vmatpush2.msra.mxu0 0.0
    %646 = vmatprep.subr.mxu0 0.0
    %647 = vmatpush2.msra.mxu0 0.0
    %648 = vmatprep.subr.mxu0 0.0
    %649 = vmatpush2.msra.mxu0 0.0
    %650 = vmatprep.subr.mxu0 0.0
    %651 = vmatpush2.msra.mxu0 0.0
    %652 = vmatprep.subr.mxu0 0.0
    %653 = vmatpush2.msra.mxu0 0.0
    %654 = vmatprep.subr.mxu0 0.0
    %655 = vmatpush2.msra.mxu0 0.0
    %656 = vmatprep.subr.mxu0 0.0
    %657 = vmatpush2.msra.mxu0 0.0
    %658 = vmatprep.subr.mxu0 0.0
    %659 = vmatpush2.msra.mxu0 0.0
    %660 = vmatprep.subr.mxu0 0.0
    %661 = vmatpush2.msra.mxu0 0.0
    %662 = vmatprep.mubr.f32.mxu0 0.0
    %663 = vmatmul.mubr.f32.gmra.mxu0 %v446
    %v664 = vpop.f32.mrf.mxu0
    %v665 = vadd.f32 0.0, %v664
    %v666 = vpop.f32.mrf.mxu0
    %667 = vdwg.mxu0
    %v668 = vadd.f32 %v597, %v665
    %v669 = vtanh.pop %v668
    %670 = vmatprep.subr.mxu0 0.0
    %671 = vmatpush1.msra.mxu0 %v223
    %672 = vmatprep.subr.mxu0 0.0
    %673 = vmatpush1.msra.mxu0 %v222
    %674 = vmatprep.subr.mxu0 0.0
    %675 = vmatpush1.msra.mxu0 %v221
    %676 = vmatprep.subr.mxu0 0.0
    %677 = vmatpush1.msra.mxu0 %v220
    %678 = vmatprep.subr.mxu0 0.0
    %679 = vmatpush1.msra.mxu0 %v219
    %680 = vmatprep.subr.mxu0 0.0
    %681 = vmatpush1.msra.mxu0 %v218
    %682 = vmatprep.subr.mxu0 0.0
    %683 = vmatpush1.msra.mxu0 %v217
    %684 = vmatprep.subr.mxu0 0.0
    %685 = vmatpush1.msra.mxu0 %v216
    %686 = vmatprep.subr.mxu0 0.0
    %687 = vmatpush1.msra.mxu0 %v215
    %688 = vmatprep.subr.mxu0 0.0
    %689 = vmatpush1.msra.mxu0 %v214
    %690 = vmatprep.subr.mxu0 0.0
    %691 = vmatpush1.msra.mxu0 %v213
    %692 = vmatprep.subr.mxu0 0.0
    %693 = vmatpush1.msra.mxu0 %v212
    %694 = vmatprep.subr.mxu0 0.0
    %695 = vmatpush1.msra.mxu0 %v211
    %696 = vmatprep.subr.mxu0 0.0
    %697 = vmatpush1.msra.mxu0 %v210
    %698 = vmatprep.subr.mxu0 0.0
    %699 = vmatpush1.msra.mxu0 %v209
    %700 = vmatprep.subr.mxu0 0.0
    %701 = vmatpush1.msra.mxu0 %v208
    %702 = vmatprep.subr.mxu0 0.0
    %703 = vmatpush2.msra.mxu0 0.0
    %704 = vmatprep.subr.mxu0 0.0
    %705 = vmatpush2.msra.mxu0 0.0
    %706 = vmatprep.subr.mxu0 0.0
    %707 = vmatpush2.msra.mxu0 0.0
    %708 = vmatprep.subr.mxu0 0.0
    %709 = vmatpush2.msra.mxu0 0.0
    %710 = vmatprep.subr.mxu0 0.0
    %711 = vmatpush2.msra.mxu0 0.0
    %712 = vmatprep.subr.mxu0 0.0
    %713 = vmatpush2.msra.mxu0 0.0
    %714 = vmatprep.subr.mxu0 0.0
    %715 = vmatpush2.msra.mxu0 0.0
    %716 = vmatprep.subr.mxu0 0.0
    %717 = vmatpush2.msra.mxu0 0.0
    %718 = vmatprep.subr.mxu0 0.0
    %719 = vmatpush2.msra.mxu0 0.0
    %720 = vmatprep.subr.mxu0 0.0
    %721 = vmatpush2.msra.mxu0 0.0
    %722 = vmatprep.subr.mxu0 0.0
    %723 = vmatpush2.msra.mxu0 0.0
    %724 = vmatprep.subr.mxu0 0.0
    %725 = vmatpush2.msra.mxu0 0.0
    %726 = vmatprep.subr.mxu0 0.0
    %727 = vmatpush2.msra.mxu0 0.0
    %728 = vmatprep.subr.mxu0 0.0
    %729 = vmatpush2.msra.mxu0 0.0
    %730 = vmatprep.subr.mxu0 0.0
    %731 = vmatpush2.msra.mxu0 0.0
    %732 = vmatprep.subr.mxu0 0.0
    %733 = vmatpush2.msra.mxu0 0.0
    %734 = vmatprep.mubr.f32.mxu0 0.0
    %735 = vmatmul.mubr.f32.gmra.mxu0 %v669
    %v736 = vpop.f32.mrf.mxu0
    %v737 = vadd.f32 0.0, %v736
    %v738 = vpop.f32.mrf.mxu0
    %739 = vdwg.mxu0
    %740 = vmatprep.subr.mxu0 0.0
    %741 = vmatpush1.msra.mxu0 %v111
    %742 = vmatprep.subr.mxu0 0.0
    %743 = vmatpush1.msra.mxu0 %v110
    %744 = vmatprep.subr.mxu0 0.0
    %745 = vmatpush1.msra.mxu0 %v109
    %746 = vmatprep.subr.mxu0 0.0
    %747 = vmatpush1.msra.mxu0 %v108
    %748 = vmatprep.subr.mxu0 0.0
    %749 = vmatpush1.msra.mxu0 %v107
    %750 = vmatprep.subr.mxu0 0.0
    %751 = vmatpush1.msra.mxu0 %v106
    %752 = vmatprep.subr.mxu0 0.0
    %753 = vmatpush1.msra.mxu0 %v105
    %754 = vmatprep.subr.mxu0 0.0
    %755 = vmatpush1.msra.mxu0 %v104
    %756 = vmatprep.subr.mxu0 0.0
    %757 = vmatpush1.msra.mxu0 %v103
    %758 = vmatprep.subr.mxu0 0.0
    %759 = vmatpush1.msra.mxu0 %v102
    %760 = vmatprep.subr.mxu0 0.0
    %761 = vmatpush1.msra.mxu0 %v101
    %762 = vmatprep.subr.mxu0 0.0
    %763 = vmatpush1.msra.mxu0 %v100
    %764 = vmatprep.subr.mxu0 0.0
    %765 = vmatpush1.msra.mxu0 %v99
    %766 = vmatprep.subr.mxu0 0.0
    %767 = vmatpush1.msra.mxu0 %v98
    %768 = vmatprep.subr.mxu0 0.0
    %769 = vmatpush1.msra.mxu0 %v97
    %770 = vmatprep.subr.mxu0 0.0
    %771 = vmatpush1.msra.mxu0 %v96
    %772 = vmatprep.subr.mxu0 0.0
    %773 = vmatpush2.msra.mxu0 0.0
    %774 = vmatprep.subr.mxu0 0.0
    %775 = vmatpush2.msra.mxu0 0.0
    %776 = vmatprep.subr.mxu0 0.0
    %777 = vmatpush2.msra.mxu0 0.0
    %778 = vmatprep.subr.mxu0 0.0
    %779 = vmatpush2.msra.mxu0 0.0
    %780 = vmatprep.subr.mxu0 0.0
    %781 = vmatpush2.msra.mxu0 0.0
    %782 = vmatprep.subr.mxu0 0.0
    %783 = vmatpush2.msra.mxu0 0.0
    %784 = vmatprep.subr.mxu0 0.0
    %785 = vmatpush2.msra.mxu0 0.0
    %786 = vmatprep.subr.mxu0 0.0
    %787 = vmatpush2.msra.mxu0 0.0
    %788 = vmatprep.subr.mxu0 0.0
    %789 = vmatpush2.msra.mxu0 0.0
    %790 = vmatprep.subr.mxu0 0.0
    %791 = vmatpush2.msra.mxu0 0.0
    %792 = vmatprep.subr.mxu0 0.0
    %793 = vmatpush2.msra.mxu0 0.0
    %794 = vmatprep.subr.mxu0 0.0
    %795 = vmatpush2.msra.mxu0 0.0
    %796 = vmatprep.subr.mxu0 0.0
    %797 = vmatpush2.msra.mxu0 0.0
    %798 = vmatprep.subr.mxu0 0.0
    %799 = vmatpush2.msra.mxu0 0.0
    %800 = vmatprep.subr.mxu0 0.0
    %801 = vmatpush2.msra.mxu0 0.0
    %802 = vmatprep.subr.mxu0 0.0
    %803 = vmatpush2.msra.mxu0 0.0
    %804 = vmatprep.mubr.f32.mxu0 0.0
    %805 = vmatmul.mubr.f32.gmra.mxu0 %v588
    %v806 = vpop.f32.mrf.mxu0
    %v807 = vadd.f32 %v737, %v806
    %v808 = vpop.f32.mrf.mxu0
    %809 = vdwg.mxu0
    %v810 = vadd.f32 %v807, %v87
    %v811 = vtanh.pop %v810
    %s812 = scalar_lea.vmem %s0, 24
    %v813 = vld [vmem:[%s812] sm:$0xff]
    %815 = vset.pattern.permute.xlu0 0
    %816 = vperm.xlu0 %815, %v813
    %v817 = vpop.permute.xlu0 %816
    %v819 = vmul.f32 %v817, %v94
    %v820 = vadd.f32 %v80, %v819
    %821 = vmatprep.subr.mxu0 0.0
    %822 = vmatpush1.msra.mxu0 %v135
    %823 = vmatprep.subr.mxu0 0.0
    %824 = vmatpush1.msra.mxu0 %v134
    %825 = vmatprep.subr.mxu0 0.0
    %826 = vmatpush1.msra.mxu0 %v133
    %827 = vmatprep.subr.mxu0 0.0
    %828 = vmatpush1.msra.mxu0 %v132
    %829 = vmatprep.subr.mxu0 0.0
    %830 = vmatpush1.msra.mxu0 %v131
    %831 = vmatprep.subr.mxu0 0.0
    %832 = vmatpush1.msra.mxu0 %v130
    %833 = vmatprep.subr.mxu0 0.0
    %834 = vmatpush1.msra.mxu0 %v129
    %835 = vmatprep.subr.mxu0 0.0
    %836 = vmatpush1.msra.mxu0 %v128
    %837 = vmatprep.subr.mxu0 0.0
    %838 = vmatpush1.msra.mxu0 %v127
    %839 = vmatprep.subr.mxu0 0.0
    %840 = vmatpush1.msra.mxu0 %v126
    %841 = vmatprep.subr.mxu0 0.0
    %842 = vmatpush1.msra.mxu0 %v125
    %843 = vmatprep.subr.mxu0 0.0
    %844 = vmatpush1.msra.mxu0 %v124
    %845 = vmatprep.subr.mxu0 0.0
    %846 = vmatpush1.msra.mxu0 %v123
    %847 = vmatprep.subr.mxu0 0.0
    %848 = vmatpush1.msra.mxu0 %v122
    %849 = vmatprep.subr.mxu0 0.0
    %850 = vmatpush1.msra.mxu0 %v121
    %851 = vmatprep.subr.mxu0 0.0
    %852 = vmatpush1.msra.mxu0 %v120
    %853 = vmatprep.subr.mxu0 0.0
    %854 = vmatpush2.msra.mxu0 0.0
    %855 = vmatprep.subr.mxu0 0.0
    %856 = vmatpush2.msra.mxu0 0.0
    %857 = vmatprep.subr.mxu0 0.0
    %858 = vmatpush2.msra.mxu0 0.0
    %859 = vmatprep.subr.mxu0 0.0
    %860 = vmatpush2.msra.mxu0 0.0
    %861 = vmatprep.subr.mxu0 0.0
    %862 = vmatpush2.msra.mxu0 0.0
    %863 = vmatprep.subr.mxu0 0.0
    %864 = vmatpush2.msra.mxu0 0.0
    %865 = vmatprep.subr.mxu0 0.0
    %866 = vmatpush2.msra.mxu0 0.0
    %867 = vmatprep.subr.mxu0 0.0
    %868 = vmatpush2.msra.mxu0 0.0
    %869 = vmatprep.subr.mxu0 0.0
    %870 = vmatpush2.msra.mxu0 0.0
    %871 = vmatprep.subr.mxu0 0.0
    %872 = vmatpush2.msra.mxu0 0.0
    %873 = vmatprep.subr.mxu0 0.0
    %874 = vmatpush2.msra.mxu0 0.0
    %875 = vmatprep.subr.mxu0 0.0
    %876 = vmatpush2.msra.mxu0 0.0
    %877 = vmatprep.subr.mxu0 0.0
    %878 = vmatpush2.msra.mxu0 0.0
    %879 = vmatprep.subr.mxu0 0.0
    %880 = vmatpush2.msra.mxu0 0.0
    %881 = vmatprep.subr.mxu0 0.0
    %882 = vmatpush2.msra.mxu0 0.0
    %883 = vmatprep.subr.mxu0 0.0
    %884 = vmatpush2.msra.mxu0 0.0
    %885 = vmatprep.mubr.f32.mxu0 0.0
    %886 = vmatmul.mubr.f32.gmra.mxu0 %v669
    %v887 = vpop.f32.mrf.mxu0
    %v888 = vadd.f32 0.0, %v887
    %v889 = vpop.f32.mrf.mxu0
    %890 = vdwg.mxu0
    %v891 = vadd.f32 %v820, %v888
    %v892 = vtanh.pop %v891
    %893 = vmatprep.subr.mxu0 0.0
    %894 = vmatpush1.msra.mxu0 %v223
    %895 = vmatprep.subr.mxu0 0.0
    %896 = vmatpush1.msra.mxu0 %v222
    %897 = vmatprep.subr.mxu0 0.0
    %898 = vmatpush1.msra.mxu0 %v221
    %899 = vmatprep.subr.mxu0 0.0
    %900 = vmatpush1.msra.mxu0 %v220
    %901 = vmatprep.subr.mxu0 0.0
    %902 = vmatpush1.msra.mxu0 %v219
    %903 = vmatprep.subr.mxu0 0.0
    %904 = vmatpush1.msra.mxu0 %v218
    %905 = vmatprep.subr.mxu0 0.0
    %906 = vmatpush1.msra.mxu0 %v217
    %907 = vmatprep.subr.mxu0 0.0
    %908 = vmatpush1.msra.mxu0 %v216
    %909 = vmatprep.subr.mxu0 0.0
    %910 = vmatpush1.msra.mxu0 %v215
    %911 = vmatprep.subr.mxu0 0.0
    %912 = vmatpush1.msra.mxu0 %v214
    %913 = vmatprep.subr.mxu0 0.0
    %914 = vmatpush1.msra.mxu0 %v213
    %915 = vmatprep.subr.mxu0 0.0
    %916 = vmatpush1.msra.mxu0 %v212
    %917 = vmatprep.subr.mxu0 0.0
    %918 = vmatpush1.msra.mxu0 %v211
    %919 = vmatprep.subr.mxu0 0.0
    %920 = vmatpush1.msra.mxu0 %v210
    %921 = vmatprep.subr.mxu0 0.0
    %922 = vmatpush1.msra.mxu0 %v209
    %923 = vmatprep.subr.mxu0 0.0
    %924 = vmatpush1.msra.mxu0 %v208
    %925 = vmatprep.subr.mxu0 0.0
    %926 = vmatpush2.msra.mxu0 0.0
    %927 = vmatprep.subr.mxu0 0.0
    %928 = vmatpush2.msra.mxu0 0.0
    %929 = vmatprep.subr.mxu0 0.0
    %930 = vmatpush2.msra.mxu0 0.0
    %931 = vmatprep.subr.mxu0 0.0
    %932 = vmatpush2.msra.mxu0 0.0
    %933 = vmatprep.subr.mxu0 0.0
    %934 = vmatpush2.msra.mxu0 0.0
    %935 = vmatprep.subr.mxu0 0.0
    %936 = vmatpush2.msra.mxu0 0.0
    %937 = vmatprep.subr.mxu0 0.0
    %938 = vmatpush2.msra.mxu0 0.0
    %939 = vmatprep.subr.mxu0 0.0
    %940 = vmatpush2.msra.mxu0 0.0
    %941 = vmatprep.subr.mxu0 0.0
    %942 = vmatpush2.msra.mxu0 0.0
    %943 = vmatprep.subr.mxu0 0.0
    %944 = vmatpush2.msra.mxu0 0.0
    %945 = vmatprep.subr.mxu0 0.0
    %946 = vmatpush2.msra.mxu0 0.0
    %947 = vmatprep.subr.mxu0 0.0
    %948 = vmatpush2.msra.mxu0 0.0
    %949 = vmatprep.subr.mxu0 0.0
    %950 = vmatpush2.msra.mxu0 0.0
    %951 = vmatprep.subr.mxu0 0.0
    %952 = vmatpush2.msra.mxu0 0.0
    %953 = vmatprep.subr.mxu0 0.0
    %954 = vmatpush2.msra.mxu0 0.0
    %955 = vmatprep.subr.mxu0 0.0
    %956 = vmatpush2.msra.mxu0 0.0
    %957 = vmatprep.mubr.f32.mxu0 0.0
    %958 = vmatmul.mubr.f32.gmra.mxu0 %v892
    %v959 = vpop.f32.mrf.mxu0
    %v960 = vadd.f32 0.0, %v959
    %v961 = vpop.f32.mrf.mxu0
    %962 = vdwg.mxu0
    %963 = vmatprep.subr.mxu0 0.0
    %964 = vmatpush1.msra.mxu0 %v111
    %965 = vmatprep.subr.mxu0 0.0
    %966 = vmatpush1.msra.mxu0 %v110
    %967 = vmatprep.subr.mxu0 0.0
    %968 = vmatpush1.msra.mxu0 %v109
    %969 = vmatprep.subr.mxu0 0.0
    %970 = vmatpush1.msra.mxu0 %v108
    %971 = vmatprep.subr.mxu0 0.0
    %972 = vmatpush1.msra.mxu0 %v107
    %973 = vmatprep.subr.mxu0 0.0
    %974 = vmatpush1.msra.mxu0 %v106
    %975 = vmatprep.subr.mxu0 0.0
    %976 = vmatpush1.msra.mxu0 %v105
    %977 = vmatprep.subr.mxu0 0.0
    %978 = vmatpush1.msra.mxu0 %v104
    %979 = vmatprep.subr.mxu0 0.0
    %980 = vmatpush1.msra.mxu0 %v103
    %981 = vmatprep.subr.mxu0 0.0
    %982 = vmatpush1.msra.mxu0 %v102
    %983 = vmatprep.subr.mxu0 0.0
    %984 = vmatpush1.msra.mxu0 %v101
    %985 = vmatprep.subr.mxu0 0.0
    %986 = vmatpush1.msra.mxu0 %v100
    %987 = vmatprep.subr.mxu0 0.0
    %988 = vmatpush1.msra.mxu0 %v99
    %989 = vmatprep.subr.mxu0 0.0
    %990 = vmatpush1.msra.mxu0 %v98
    %991 = vmatprep.subr.mxu0 0.0
    %992 = vmatpush1.msra.mxu0 %v97
    %993 = vmatprep.subr.mxu0 0.0
    %994 = vmatpush1.msra.mxu0 %v96
    %995 = vmatprep.subr.mxu0 0.0
    %996 = vmatpush2.msra.mxu0 0.0
    %997 = vmatprep.subr.mxu0 0.0
    %998 = vmatpush2.msra.mxu0 0.0
    %999 = vmatprep.subr.mxu0 0.0
    %1000 = vmatpush2.msra.mxu0 0.0
    %1001 = vmatprep.subr.mxu0 0.0
    %1002 = vmatpush2.msra.mxu0 0.0
    %1003 = vmatprep.subr.mxu0 0.0
    %1004 = vmatpush2.msra.mxu0 0.0
    %1005 = vmatprep.subr.mxu0 0.0
    %1006 = vmatpush2.msra.mxu0 0.0
    %1007 = vmatprep.subr.mxu0 0.0
    %1008 = vmatpush2.msra.mxu0 0.0
    %1009 = vmatprep.subr.mxu0 0.0
    %1010 = vmatpush2.msra.mxu0 0.0
    %1011 = vmatprep.subr.mxu0 0.0
    %1012 = vmatpush2.msra.mxu0 0.0
    %1013 = vmatprep.subr.mxu0 0.0
    %1014 = vmatpush2.msra.mxu0 0.0
    %1015 = vmatprep.subr.mxu0 0.0
    %1016 = vmatpush2.msra.mxu0 0.0
    %1017 = vmatprep.subr.mxu0 0.0
    %1018 = vmatpush2.msra.mxu0 0.0
    %1019 = vmatprep.subr.mxu0 0.0
    %1020 = vmatpush2.msra.mxu0 0.0
    %1021 = vmatprep.subr.mxu0 0.0
    %1022 = vmatpush2.msra.mxu0 0.0
    %1023 = vmatprep.subr.mxu0 0.0
    %1024 = vmatpush2.msra.mxu0 0.0
    %1025 = vmatprep.subr.mxu0 0.0
    %1026 = vmatpush2.msra.mxu0 0.0
    %1027 = vmatprep.mubr.f32.mxu0 0.0
    %1028 = vmatmul.mubr.f32.gmra.mxu0 %v811
    %v1029 = vpop.f32.mrf.mxu0
    %v1030 = vadd.f32 %v960, %v1029
    %v1031 = vpop.f32.mrf.mxu0
    %1032 = vdwg.mxu0
    %v1033 = vadd.f32 %v1030, %v87
    %v1034 = vtanh.pop %v1033
    %s1035 = scalar_lea.vmem %s0, 32
    %v1036 = vld [vmem:[%s1035] sm:$0xff]
    %1038 = vset.pattern.permute.xlu0 0
    %1039 = vperm.xlu0 %1038, %v1036
    %v1040 = vpop.permute.xlu0 %1039
    %v1042 = vmul.f32 %v1040, %v94
    %v1043 = vadd.f32 %v80, %v1042
    %1044 = vmatprep.subr.mxu0 0.0
    %1045 = vmatpush1.msra.mxu0 %v135
    %1046 = vmatprep.subr.mxu0 0.0
    %1047 = vmatpush1.msra.mxu0 %v134
    %1048 = vmatprep.subr.mxu0 0.0
    %1049 = vmatpush1.msra.mxu0 %v133
    %1050 = vmatprep.subr.mxu0 0.0
    %1051 = vmatpush1.msra.mxu0 %v132
    %1052 = vmatprep.subr.mxu0 0.0
    %1053 = vmatpush1.msra.mxu0 %v131
    %1054 = vmatprep.subr.mxu0 0.0
    %1055 = vmatpush1.msra.mxu0 %v130
    %1056 = vmatprep.subr.mxu0 0.0
    %1057 = vmatpush1.msra.mxu0 %v129
    %1058 = vmatprep.subr.mxu0 0.0
    %1059 = vmatpush1.msra.mxu0 %v128
    %1060 = vmatprep.subr.mxu0 0.0
    %1061 = vmatpush1.msra.mxu0 %v127
    %1062 = vmatprep.subr.mxu0 0.0
    %1063 = vmatpush1.msra.mxu0 %v126
    %1064 = vmatprep.subr.mxu0 0.0
    %1065 = vmatpush1.msra.mxu0 %v125
    %1066 = vmatprep.subr.mxu0 0.0
    %1067 = vmatpush1.msra.mxu0 %v124
    %1068 = vmatprep.subr.mxu0 0.0
    %1069 = vmatpush1.msra.mxu0 %v123
    %1070 = vmatprep.subr.mxu0 0.0
    %1071 = vmatpush1.msra.mxu0 %v122
    %1072 = vmatprep.subr.mxu0 0.0
    %1073 = vmatpush1.msra.mxu0 %v121
    %1074 = vmatprep.subr.mxu0 0.0
    %1075 = vmatpush1.msra.mxu0 %v120
    %1076 = vmatprep.subr.mxu0 0.0
    %1077 = vmatpush2.msra.mxu0 0.0
    %1078 = vmatprep.subr.mxu0 0.0
    %1079 = vmatpush2.msra.mxu0 0.0
    %1080 = vmatprep.subr.mxu0 0.0
    %1081 = vmatpush2.msra.mxu0 0.0
    %1082 = vmatprep.subr.mxu0 0.0
    %1083 = vmatpush2.msra.mxu0 0.0
    %1084 = vmatprep.subr.mxu0 0.0
    %1085 = vmatpush2.msra.mxu0 0.0
    %1086 = vmatprep.subr.mxu0 0.0
    %1087 = vmatpush2.msra.mxu0 0.0
    %1088 = vmatprep.subr.mxu0 0.0
    %1089 = vmatpush2.msra.mxu0 0.0
    %1090 = vmatprep.subr.mxu0 0.0
    %1091 = vmatpush2.msra.mxu0 0.0
    %1092 = vmatprep.subr.mxu0 0.0
    %1093 = vmatpush2.msra.mxu0 0.0
    %1094 = vmatprep.subr.mxu0 0.0
    %1095 = vmatpush2.msra.mxu0 0.0
    %1096 = vmatprep.subr.mxu0 0.0
    %1097 = vmatpush2.msra.mxu0 0.0
    %1098 = vmatprep.subr.mxu0 0.0
    %1099 = vmatpush2.msra.mxu0 0.0
    %1100 = vmatprep.subr.mxu0 0.0
    %1101 = vmatpush2.msra.mxu0 0.0
    %1102 = vmatprep.subr.mxu0 0.0
    %1103 = vmatpush2.msra.mxu0 0.0
    %1104 = vmatprep.subr.mxu0 0.0
    %1105 = vmatpush2.msra.mxu0 0.0
    %1106 = vmatprep.subr.mxu0 0.0
    %1107 = vmatpush2.msra.mxu0 0.0
    %1108 = vmatprep.mubr.f32.mxu0 0.0
    %1109 = vmatmul.mubr.f32.gmra.mxu0 %v892
    %v1110 = vpop.f32.mrf.mxu0
    %v1111 = vadd.f32 0.0, %v1110
    %v1112 = vpop.f32.mrf.mxu0
    %1113 = vdwg.mxu0
    %v1114 = vadd.f32 %v1043, %v1111
    %v1115 = vtanh.pop %v1114
    %1116 = vmatprep.subr.mxu0 0.0
    %1117 = vmatpush1.msra.mxu0 %v223
    %1118 = vmatprep.subr.mxu0 0.0
    %1119 = vmatpush1.msra.mxu0 %v222
    %1120 = vmatprep.subr.mxu0 0.0
    %1121 = vmatpush1.msra.mxu0 %v221
    %1122 = vmatprep.subr.mxu0 0.0
    %1123 = vmatpush1.msra.mxu0 %v220
    %1124 = vmatprep.subr.mxu0 0.0
    %1125 = vmatpush1.msra.mxu0 %v219
    %1126 = vmatprep.subr.mxu0 0.0
    %1127 = vmatpush1.msra.mxu0 %v218
    %1128 = vmatprep.subr.mxu0 0.0
    %1129 = vmatpush1.msra.mxu0 %v217
    %1130 = vmatprep.subr.mxu0 0.0
    %1131 = vmatpush1.msra.mxu0 %v216
    %1132 = vmatprep.subr.mxu0 0.0
    %1133 = vmatpush1.msra.mxu0 %v215
    %1134 = vmatprep.subr.mxu0 0.0
    %1135 = vmatpush1.msra.mxu0 %v214
    %1136 = vmatprep.subr.mxu0 0.0
    %1137 = vmatpush1.msra.mxu0 %v213
    %1138 = vmatprep.subr.mxu0 0.0
    %1139 = vmatpush1.msra.mxu0 %v212
    %1140 = vmatprep.subr.mxu0 0.0
    %1141 = vmatpush1.msra.mxu0 %v211
    %1142 = vmatprep.subr.mxu0 0.0
    %1143 = vmatpush1.msra.mxu0 %v210
    %1144 = vmatprep.subr.mxu0 0.0
    %1145 = vmatpush1.msra.mxu0 %v209
    %1146 = vmatprep.subr.mxu0 0.0
    %1147 = vmatpush1.msra.mxu0 %v208
    %1148 = vmatprep.subr.mxu0 0.0
    %1149 = vmatpush2.msra.mxu0 0.0
    %1150 = vmatprep.subr.mxu0 0.0
    %1151 = vmatpush2.msra.mxu0 0.0
    %1152 = vmatprep.subr.mxu0 0.0
    %1153 = vmatpush2.msra.mxu0 0.0
    %1154 = vmatprep.subr.mxu0 0.0
    %1155 = vmatpush2.msra.mxu0 0.0
    %1156 = vmatprep.subr.mxu0 0.0
    %1157 = vmatpush2.msra.mxu0 0.0
    %1158 = vmatprep.subr.mxu0 0.0
    %1159 = vmatpush2.msra.mxu0 0.0
    %1160 = vmatprep.subr.mxu0 0.0
    %1161 = vmatpush2.msra.mxu0 0.0
    %1162 = vmatprep.subr.mxu0 0.0
    %1163 = vmatpush2.msra.mxu0 0.0
    %1164 = vmatprep.subr.mxu0 0.0
    %1165 = vmatpush2.msra.mxu0 0.0
    %1166 = vmatprep.subr.mxu0 0.0
    %1167 = vmatpush2.msra.mxu0 0.0
    %1168 = vmatprep.subr.mxu0 0.0
    %1169 = vmatpush2.msra.mxu0 0.0
    %1170 = vmatprep.subr.mxu0 0.0
    %1171 = vmatpush2.msra.mxu0 0.0
    %1172 = vmatprep.subr.mxu0 0.0
    %1173 = vmatpush2.msra.mxu0 0.0
    %1174 = vmatprep.subr.mxu0 0.0
    %1175 = vmatpush2.msra.mxu0 0.0
    %1176 = vmatprep.subr.mxu0 0.0
    %1177 = vmatpush2.msra.mxu0 0.0
    %1178 = vmatprep.subr.mxu0 0.0
    %1179 = vmatpush2.msra.mxu0 0.0
    %1180 = vmatprep.mubr.f32.mxu0 0.0
    %1181 = vmatmul.mubr.f32.gmra.mxu0 %v1115
    %v1182 = vpop.f32.mrf.mxu0
    %v1183 = vadd.f32 0.0, %v1182
    %v1184 = vpop.f32.mrf.mxu0
    %1185 = vdwg.mxu0
    %1186 = vmatprep.subr.mxu0 0.0
    %1187 = vmatpush1.msra.mxu0 %v111
    %1188 = vmatprep.subr.mxu0 0.0
    %1189 = vmatpush1.msra.mxu0 %v110
    %1190 = vmatprep.subr.mxu0 0.0
    %1191 = vmatpush1.msra.mxu0 %v109
    %1192 = vmatprep.subr.mxu0 0.0
    %1193 = vmatpush1.msra.mxu0 %v108
    %1194 = vmatprep.subr.mxu0 0.0
    %1195 = vmatpush1.msra.mxu0 %v107
    %1196 = vmatprep.subr.mxu0 0.0
    %1197 = vmatpush1.msra.mxu0 %v106
    %1198 = vmatprep.subr.mxu0 0.0
    %1199 = vmatpush1.msra.mxu0 %v105
    %1200 = vmatprep.subr.mxu0 0.0
    %1201 = vmatpush1.msra.mxu0 %v104
    %1202 = vmatprep.subr.mxu0 0.0
    %1203 = vmatpush1.msra.mxu0 %v103
    %1204 = vmatprep.subr.mxu0 0.0
    %1205 = vmatpush1.msra.mxu0 %v102
    %1206 = vmatprep.subr.mxu0 0.0
    %1207 = vmatpush1.msra.mxu0 %v101
    %1208 = vmatprep.subr.mxu0 0.0
    %1209 = vmatpush1.msra.mxu0 %v100
    %1210 = vmatprep.subr.mxu0 0.0
    %1211 = vmatpush1.msra.mxu0 %v99
    %1212 = vmatprep.subr.mxu0 0.0
    %1213 = vmatpush1.msra.mxu0 %v98
    %1214 = vmatprep.subr.mxu0 0.0
    %1215 = vmatpush1.msra.mxu0 %v97
    %1216 = vmatprep.subr.mxu0 0.0
    %1217 = vmatpush1.msra.mxu0 %v96
    %1218 = vmatprep.subr.mxu0 0.0
    %1219 = vmatpush2.msra.mxu0 0.0
    %1220 = vmatprep.subr.mxu0 0.0
    %1221 = vmatpush2.msra.mxu0 0.0
    %1222 = vmatprep.subr.mxu0 0.0
    %1223 = vmatpush2.msra.mxu0 0.0
    %1224 = vmatprep.subr.mxu0 0.0
    %1225 = vmatpush2.msra.mxu0 0.0
    %1226 = vmatprep.subr.mxu0 0.0
    %1227 = vmatpush2.msra.mxu0 0.0
    %1228 = vmatprep.subr.mxu0 0.0
    %1229 = vmatpush2.msra.mxu0 0.0
    %1230 = vmatprep.subr.mxu0 0.0
    %1231 = vmatpush2.msra.mxu0 0.0
    %1232 = vmatprep.subr.mxu0 0.0
    %1233 = vmatpush2.msra.mxu0 0.0
    %1234 = vmatprep.subr.mxu0 0.0
    %1235 = vmatpush2.msra.mxu0 0.0
    %1236 = vmatprep.subr.mxu0 0.0
    %1237 = vmatpush2.msra.mxu0 0.0
    %1238 = vmatprep.subr.mxu0 0.0
    %1239 = vmatpush2.msra.mxu0 0.0
    %1240 = vmatprep.subr.mxu0 0.0
    %1241 = vmatpush2.msra.mxu0 0.0
    %1242 = vmatprep.subr.mxu0 0.0
    %1243 = vmatpush2.msra.mxu0 0.0
    %1244 = vmatprep.subr.mxu0 0.0
    %1245 = vmatpush2.msra.mxu0 0.0
    %1246 = vmatprep.subr.mxu0 0.0
    %1247 = vmatpush2.msra.mxu0 0.0
    %1248 = vmatprep.subr.mxu0 0.0
    %1249 = vmatpush2.msra.mxu0 0.0
    %1250 = vmatprep.mubr.f32.mxu0 0.0
    %1251 = vmatmul.mubr.f32.gmra.mxu0 %v1034
    %v1252 = vpop.f32.mrf.mxu0
    %v1253 = vadd.f32 %v1183, %v1252
    %v1254 = vpop.f32.mrf.mxu0
    %1255 = vdwg.mxu0
    %v1256 = vadd.f32 %v1253, %v87
    %v1257 = vtanh.pop %v1256
    %s1258 = scalar_lea.vmem %s0, 40
    %v1259 = vld [vmem:[%s1258] sm:$0xff]
    %1261 = vset.pattern.permute.xlu0 0
    %1262 = vperm.xlu0 %1261, %v1259
    %v1263 = vpop.permute.xlu0 %1262
    %v1265 = vmul.f32 %v1263, %v94
    %v1266 = vadd.f32 %v80, %v1265
    %1267 = vmatprep.subr.mxu0 0.0
    %1268 = vmatpush1.msra.mxu0 %v135
    %1269 = vmatprep.subr.mxu0 0.0
    %1270 = vmatpush1.msra.mxu0 %v134
    %1271 = vmatprep.subr.mxu0 0.0
    %1272 = vmatpush1.msra.mxu0 %v133
    %1273 = vmatprep.subr.mxu0 0.0
    %1274 = vmatpush1.msra.mxu0 %v132
    %1275 = vmatprep.subr.mxu0 0.0
    %1276 = vmatpush1.msra.mxu0 %v131
    %1277 = vmatprep.subr.mxu0 0.0
    %1278 = vmatpush1.msra.mxu0 %v130
    %1279 = vmatprep.subr.mxu0 0.0
    %1280 = vmatpush1.msra.mxu0 %v129
    %1281 = vmatprep.subr.mxu0 0.0
    %1282 = vmatpush1.msra.mxu0 %v128
    %1283 = vmatprep.subr.mxu0 0.0
    %1284 = vmatpush1.msra.mxu0 %v127
    %1285 = vmatprep.subr.mxu0 0.0
    %1286 = vmatpush1.msra.mxu0 %v126
    %1287 = vmatprep.subr.mxu0 0.0
    %1288 = vmatpush1.msra.mxu0 %v125
    %1289 = vmatprep.subr.mxu0 0.0
    %1290 = vmatpush1.msra.mxu0 %v124
    %1291 = vmatprep.subr.mxu0 0.0
    %1292 = vmatpush1.msra.mxu0 %v123
    %1293 = vmatprep.subr.mxu0 0.0
    %1294 = vmatpush1.msra.mxu0 %v122
    %1295 = vmatprep.subr.mxu0 0.0
    %1296 = vmatpush1.msra.mxu0 %v121
    %1297 = vmatprep.subr.mxu0 0.0
    %1298 = vmatpush1.msra.mxu0 %v120
    %1299 = vmatprep.subr.mxu0 0.0
    %1300 = vmatpush2.msra.mxu0 0.0
    %1301 = vmatprep.subr.mxu0 0.0
    %1302 = vmatpush2.msra.mxu0 0.0
    %1303 = vmatprep.subr.mxu0 0.0
    %1304 = vmatpush2.msra.mxu0 0.0
    %1305 = vmatprep.subr.mxu0 0.0
    %1306 = vmatpush2.msra.mxu0 0.0
    %1307 = vmatprep.subr.mxu0 0.0
    %1308 = vmatpush2.msra.mxu0 0.0
    %1309 = vmatprep.subr.mxu0 0.0
    %1310 = vmatpush2.msra.mxu0 0.0
    %1311 = vmatprep.subr.mxu0 0.0
    %1312 = vmatpush2.msra.mxu0 0.0
    %1313 = vmatprep.subr.mxu0 0.0
    %1314 = vmatpush2.msra.mxu0 0.0
    %1315 = vmatprep.subr.mxu0 0.0
    %1316 = vmatpush2.msra.mxu0 0.0
    %1317 = vmatprep.subr.mxu0 0.0
    %1318 = vmatpush2.msra.mxu0 0.0
    %1319 = vmatprep.subr.mxu0 0.0
    %1320 = vmatpush2.msra.mxu0 0.0
    %1321 = vmatprep.subr.mxu0 0.0
    %1322 = vmatpush2.msra.mxu0 0.0
    %1323 = vmatprep.subr.mxu0 0.0
    %1324 = vmatpush2.msra.mxu0 0.0
    %1325 = vmatprep.subr.mxu0 0.0
    %1326 = vmatpush2.msra.mxu0 0.0
    %1327 = vmatprep.subr.mxu0 0.0
    %1328 = vmatpush2.msra.mxu0 0.0
    %1329 = vmatprep.subr.mxu0 0.0
    %1330 = vmatpush2.msra.mxu0 0.0
    %1331 = vmatprep.mubr.f32.mxu0 0.0
    %1332 = vmatmul.mubr.f32.gmra.mxu0 %v1115
    %v1333 = vpop.f32.mrf.mxu0
    %v1334 = vadd.f32 0.0, %v1333
    %v1335 = vpop.f32.mrf.mxu0
    %1336 = vdwg.mxu0
    %v1337 = vadd.f32 %v1266, %v1334
    %v1338 = vtanh.pop %v1337
    %1339 = vmatprep.subr.mxu0 0.0
    %1340 = vmatpush1.msra.mxu0 %v223
    %1341 = vmatprep.subr.mxu0 0.0
    %1342 = vmatpush1.msra.mxu0 %v222
    %1343 = vmatprep.subr.mxu0 0.0
    %1344 = vmatpush1.msra.mxu0 %v221
    %1345 = vmatprep.subr.mxu0 0.0
    %1346 = vmatpush1.msra.mxu0 %v220
    %1347 = vmatprep.subr.mxu0 0.0
    %1348 = vmatpush1.msra.mxu0 %v219
    %1349 = vmatprep.subr.mxu0 0.0
    %1350 = vmatpush1.msra.mxu0 %v218
    %1351 = vmatprep.subr.mxu0 0.0
    %1352 = vmatpush1.msra.mxu0 %v217
    %1353 = vmatprep.subr.mxu0 0.0
    %1354 = vmatpush1.msra.mxu0 %v216
    %1355 = vmatprep.subr.mxu0 0.0
    %1356 = vmatpush1.msra.mxu0 %v215
    %1357 = vmatprep.subr.mxu0 0.0
    %1358 = vmatpush1.msra.mxu0 %v214
    %1359 = vmatprep.subr.mxu0 0.0
    %1360 = vmatpush1.msra.mxu0 %v213
    %1361 = vmatprep.subr.mxu0 0.0
    %1362 = vmatpush1.msra.mxu0 %v212
    %1363 = vmatprep.subr.mxu0 0.0
    %1364 = vmatpush1.msra.mxu0 %v211
    %1365 = vmatprep.subr.mxu0 0.0
    %1366 = vmatpush1.msra.mxu0 %v210
    %1367 = vmatprep.subr.mxu0 0.0
    %1368 = vmatpush1.msra.mxu0 %v209
    %1369 = vmatprep.subr.mxu0 0.0
    %1370 = vmatpush1.msra.mxu0 %v208
    %1371 = vmatprep.subr.mxu0 0.0
    %1372 = vmatpush2.msra.mxu0 0.0
    %1373 = vmatprep.subr.mxu0 0.0
    %1374 = vmatpush2.msra.mxu0 0.0
    %1375 = vmatprep.subr.mxu0 0.0
    %1376 = vmatpush2.msra.mxu0 0.0
    %1377 = vmatprep.subr.mxu0 0.0
    %1378 = vmatpush2.msra.mxu0 0.0
    %1379 = vmatprep.subr.mxu0 0.0
    %1380 = vmatpush2.msra.mxu0 0.0
    %1381 = vmatprep.subr.mxu0 0.0
    %1382 = vmatpush2.msra.mxu0 0.0
    %1383 = vmatprep.subr.mxu0 0.0
    %1384 = vmatpush2.msra.mxu0 0.0
    %1385 = vmatprep.subr.mxu0 0.0
    %1386 = vmatpush2.msra.mxu0 0.0
    %1387 = vmatprep.subr.mxu0 0.0
    %1388 = vmatpush2.msra.mxu0 0.0
    %1389 = vmatprep.subr.mxu0 0.0
    %1390 = vmatpush2.msra.mxu0 0.0
    %1391 = vmatprep.subr.mxu0 0.0
    %1392 = vmatpush2.msra.mxu0 0.0
    %1393 = vmatprep.subr.mxu0 0.0
    %1394 = vmatpush2.msra.mxu0 0.0
    %1395 = vmatprep.subr.mxu0 0.0
    %1396 = vmatpush2.msra.mxu0 0.0
    %1397 = vmatprep.subr.mxu0 0.0
    %1398 = vmatpush2.msra.mxu0 0.0
    %1399 = vmatprep.subr.mxu0 0.0
    %1400 = vmatpush2.msra.mxu0 0.0
    %1401 = vmatprep.subr.mxu0 0.0
    %1402 = vmatpush2.msra.mxu0 0.0
    %1403 = vmatprep.mubr.f32.mxu0 0.0
    %1404 = vmatmul.mubr.f32.gmra.mxu0 %v1338
    %v1405 = vpop.f32.mrf.mxu0
    %v1406 = vadd.f32 0.0, %v1405
    %v1407 = vpop.f32.mrf.mxu0
    %1408 = vdwg.mxu0
    %1409 = vmatprep.subr.mxu0 0.0
    %1410 = vmatpush1.msra.mxu0 %v111
    %1411 = vmatprep.subr.mxu0 0.0
    %1412 = vmatpush1.msra.mxu0 %v110
    %1413 = vmatprep.subr.mxu0 0.0
    %1414 = vmatpush1.msra.mxu0 %v109
    %1415 = vmatprep.subr.mxu0 0.0
    %1416 = vmatpush1.msra.mxu0 %v108
    %1417 = vmatprep.subr.mxu0 0.0
    %1418 = vmatpush1.msra.mxu0 %v107
    %1419 = vmatprep.subr.mxu0 0.0
    %1420 = vmatpush1.msra.mxu0 %v106
    %1421 = vmatprep.subr.mxu0 0.0
    %1422 = vmatpush1.msra.mxu0 %v105
    %1423 = vmatprep.subr.mxu0 0.0
    %1424 = vmatpush1.msra.mxu0 %v104
    %1425 = vmatprep.subr.mxu0 0.0
    %1426 = vmatpush1.msra.mxu0 %v103
    %1427 = vmatprep.subr.mxu0 0.0
    %1428 = vmatpush1.msra.mxu0 %v102
    %1429 = vmatprep.subr.mxu0 0.0
    %1430 = vmatpush1.msra.mxu0 %v101
    %1431 = vmatprep.subr.mxu0 0.0
    %1432 = vmatpush1.msra.mxu0 %v100
    %1433 = vmatprep.subr.mxu0 0.0
    %1434 = vmatpush1.msra.mxu0 %v99
    %1435 = vmatprep.subr.mxu0 0.0
    %1436 = vmatpush1.msra.mxu0 %v98
    %1437 = vmatprep.subr.mxu0 0.0
    %1438 = vmatpush1.msra.mxu0 %v97
    %1439 = vmatprep.subr.mxu0 0.0
    %1440 = vmatpush1.msra.mxu0 %v96
    %1441 = vmatprep.subr.mxu0 0.0
    %1442 = vmatpush2.msra.mxu0 0.0
    %1443 = vmatprep.subr.mxu0 0.0
    %1444 = vmatpush2.msra.mxu0 0.0
    %1445 = vmatprep.subr.mxu0 0.0
    %1446 = vmatpush2.msra.mxu0 0.0
    %1447 = vmatprep.subr.mxu0 0.0
    %1448 = vmatpush2.msra.mxu0 0.0
    %1449 = vmatprep.subr.mxu0 0.0
    %1450 = vmatpush2.msra.mxu0 0.0
    %1451 = vmatprep.subr.mxu0 0.0
    %1452 = vmatpush2.msra.mxu0 0.0
    %1453 = vmatprep.subr.mxu0 0.0
    %1454 = vmatpush2.msra.mxu0 0.0
    %1455 = vmatprep.subr.mxu0 0.0
    %1456 = vmatpush2.msra.mxu0 0.0
    %1457 = vmatprep.subr.mxu0 0.0
    %1458 = vmatpush2.msra.mxu0 0.0
    %1459 = vmatprep.subr.mxu0 0.0
    %1460 = vmatpush2.msra.mxu0 0.0
    %1461 = vmatprep.subr.mxu0 0.0
    %1462 = vmatpush2.msra.mxu0 0.0
    %1463 = vmatprep.subr.mxu0 0.0
    %1464 = vmatpush2.msra.mxu0 0.0
    %1465 = vmatprep.subr.mxu0 0.0
    %1466 = vmatpush2.msra.mxu0 0.0
    %1467 = vmatprep.subr.mxu0 0.0
    %1468 = vmatpush2.msra.mxu0 0.0
    %1469 = vmatprep.subr.mxu0 0.0
    %1470 = vmatpush2.msra.mxu0 0.0
    %1471 = vmatprep.subr.mxu0 0.0
    %1472 = vmatpush2.msra.mxu0 0.0
    %1473 = vmatprep.mubr.f32.mxu0 0.0
    %1474 = vmatmul.mubr.f32.gmra.mxu0 %v1257
    %v1475 = vpop.f32.mrf.mxu0
    %v1476 = vadd.f32 %v1406, %v1475
    %v1477 = vpop.f32.mrf.mxu0
    %1478 = vdwg.mxu0
    %v1479 = vadd.f32 %v1476, %v87
    %v1480 = vtanh.pop %v1479
    %s1481 = scalar_lea.vmem %s0, 48
    %v1482 = vld [vmem:[%s1481] sm:$0xff]
    %1484 = vset.pattern.permute.xlu0 0
    %1485 = vperm.xlu0 %1484, %v1482
    %v1486 = vpop.permute.xlu0 %1485
    %v1488 = vmul.f32 %v1486, %v94
    %v1489 = vadd.f32 %v80, %v1488
    %1490 = vmatprep.subr.mxu0 0.0
    %1491 = vmatpush1.msra.mxu0 %v135
    %1492 = vmatprep.subr.mxu0 0.0
    %1493 = vmatpush1.msra.mxu0 %v134
    %1494 = vmatprep.subr.mxu0 0.0
    %1495 = vmatpush1.msra.mxu0 %v133
    %1496 = vmatprep.subr.mxu0 0.0
    %1497 = vmatpush1.msra.mxu0 %v132
    %1498 = vmatprep.subr.mxu0 0.0
    %1499 = vmatpush1.msra.mxu0 %v131
    %1500 = vmatprep.subr.mxu0 0.0
    %1501 = vmatpush1.msra.mxu0 %v130
    %1502 = vmatprep.subr.mxu0 0.0
    %1503 = vmatpush1.msra.mxu0 %v129
    %1504 = vmatprep.subr.mxu0 0.0
    %1505 = vmatpush1.msra.mxu0 %v128
    %1506 = vmatprep.subr.mxu0 0.0
    %1507 = vmatpush1.msra.mxu0 %v127
    %1508 = vmatprep.subr.mxu0 0.0
    %1509 = vmatpush1.msra.mxu0 %v126
    %1510 = vmatprep.subr.mxu0 0.0
    %1511 = vmatpush1.msra.mxu0 %v125
    %1512 = vmatprep.subr.mxu0 0.0
    %1513 = vmatpush1.msra.mxu0 %v124
    %1514 = vmatprep.subr.mxu0 0.0
    %1515 = vmatpush1.msra.mxu0 %v123
    %1516 = vmatprep.subr.mxu0 0.0
    %1517 = vmatpush1.msra.mxu0 %v122
    %1518 = vmatprep.subr.mxu0 0.0
    %1519 = vmatpush1.msra.mxu0 %v121
    %1520 = vmatprep.subr.mxu0 0.0
    %1521 = vmatpush1.msra.mxu0 %v120
    %1522 = vmatprep.subr.mxu0 0.0
    %1523 = vmatpush2.msra.mxu0 0.0
    %1524 = vmatprep.subr.mxu0 0.0
    %1525 = vmatpush2.msra.mxu0 0.0
    %1526 = vmatprep.subr.mxu0 0.0
    %1527 = vmatpush2.msra.mxu0 0.0
    %1528 = vmatprep.subr.mxu0 0.0
    %1529 = vmatpush2.msra.mxu0 0.0
    %1530 = vmatprep.subr.mxu0 0.0
    %1531 = vmatpush2.msra.mxu0 0.0
    %1532 = vmatprep.subr.mxu0 0.0
    %1533 = vmatpush2.msra.mxu0 0.0
    %1534 = vmatprep.subr.mxu0 0.0
    %1535 = vmatpush2.msra.mxu0 0.0
    %1536 = vmatprep.subr.mxu0 0.0
    %1537 = vmatpush2.msra.mxu0 0.0
    %1538 = vmatprep.subr.mxu0 0.0
    %1539 = vmatpush2.msra.mxu0 0.0
    %1540 = vmatprep.subr.mxu0 0.0
    %1541 = vmatpush2.msra.mxu0 0.0
    %1542 = vmatprep.subr.mxu0 0.0
    %1543 = vmatpush2.msra.mxu0 0.0
    %1544 = vmatprep.subr.mxu0 0.0
    %1545 = vmatpush2.msra.mxu0 0.0
    %1546 = vmatprep.subr.mxu0 0.0
    %1547 = vmatpush2.msra.mxu0 0.0
    %1548 = vmatprep.subr.mxu0 0.0
    %1549 = vmatpush2.msra.mxu0 0.0
    %1550 = vmatprep.subr.mxu0 0.0
    %1551 = vmatpush2.msra.mxu0 0.0
    %1552 = vmatprep.subr.mxu0 0.0
    %1553 = vmatpush2.msra.mxu0 0.0
    %1554 = vmatprep.mubr.f32.mxu0 0.0
    %1555 = vmatmul.mubr.f32.gmra.mxu0 %v1338
    %v1556 = vpop.f32.mrf.mxu0
    %v1557 = vadd.f32 0.0, %v1556
    %v1558 = vpop.f32.mrf.mxu0
    %1559 = vdwg.mxu0
    %v1560 = vadd.f32 %v1489, %v1557
    %v1561 = vtanh.pop %v1560
    %1562 = vmatprep.subr.mxu0 0.0
    %1563 = vmatpush1.msra.mxu0 %v223
    %1564 = vmatprep.subr.mxu0 0.0
    %1565 = vmatpush1.msra.mxu0 %v222
    %1566 = vmatprep.subr.mxu0 0.0
    %1567 = vmatpush1.msra.mxu0 %v221
    %1568 = vmatprep.subr.mxu0 0.0
    %1569 = vmatpush1.msra.mxu0 %v220
    %1570 = vmatprep.subr.mxu0 0.0
    %1571 = vmatpush1.msra.mxu0 %v219
    %1572 = vmatprep.subr.mxu0 0.0
    %1573 = vmatpush1.msra.mxu0 %v218
    %1574 = vmatprep.subr.mxu0 0.0
    %1575 = vmatpush1.msra.mxu0 %v217
    %1576 = vmatprep.subr.mxu0 0.0
    %1577 = vmatpush1.msra.mxu0 %v216
    %1578 = vmatprep.subr.mxu0 0.0
    %1579 = vmatpush1.msra.mxu0 %v215
    %1580 = vmatprep.subr.mxu0 0.0
    %1581 = vmatpush1.msra.mxu0 %v214
    %1582 = vmatprep.subr.mxu0 0.0
    %1583 = vmatpush1.msra.mxu0 %v213
    %1584 = vmatprep.subr.mxu0 0.0
    %1585 = vmatpush1.msra.mxu0 %v212
    %1586 = vmatprep.subr.mxu0 0.0
    %1587 = vmatpush1.msra.mxu0 %v211
    %1588 = vmatprep.subr.mxu0 0.0
    %1589 = vmatpush1.msra.mxu0 %v210
    %1590 = vmatprep.subr.mxu0 0.0
    %1591 = vmatpush1.msra.mxu0 %v209
    %1592 = vmatprep.subr.mxu0 0.0
    %1593 = vmatpush1.msra.mxu0 %v208
    %1594 = vmatprep.subr.mxu0 0.0
    %1595 = vmatpush2.msra.mxu0 0.0
    %1596 = vmatprep.subr.mxu0 0.0
    %1597 = vmatpush2.msra.mxu0 0.0
    %1598 = vmatprep.subr.mxu0 0.0
    %1599 = vmatpush2.msra.mxu0 0.0
    %1600 = vmatprep.subr.mxu0 0.0
    %1601 = vmatpush2.msra.mxu0 0.0
    %1602 = vmatprep.subr.mxu0 0.0
    %1603 = vmatpush2.msra.mxu0 0.0
    %1604 = vmatprep.subr.mxu0 0.0
    %1605 = vmatpush2.msra.mxu0 0.0
    %1606 = vmatprep.subr.mxu0 0.0
    %1607 = vmatpush2.msra.mxu0 0.0
    %1608 = vmatprep.subr.mxu0 0.0
    %1609 = vmatpush2.msra.mxu0 0.0
    %1610 = vmatprep.subr.mxu0 0.0
    %1611 = vmatpush2.msra.mxu0 0.0
    %1612 = vmatprep.subr.mxu0 0.0
    %1613 = vmatpush2.msra.mxu0 0.0
    %1614 = vmatprep.subr.mxu0 0.0
    %1615 = vmatpush2.msra.mxu0 0.0
    %1616 = vmatprep.subr.mxu0 0.0
    %1617 = vmatpush2.msra.mxu0 0.0
    %1618 = vmatprep.subr.mxu0 0.0
    %1619 = vmatpush2.msra.mxu0 0.0
    %1620 = vmatprep.subr.mxu0 0.0
    %1621 = vmatpush2.msra.mxu0 0.0
    %1622 = vmatprep.subr.mxu0 0.0
    %1623 = vmatpush2.msra.mxu0 0.0
    %1624 = vmatprep.subr.mxu0 0.0
    %1625 = vmatpush2.msra.mxu0 0.0
    %1626 = vmatprep.mubr.f32.mxu0 0.0
    %1627 = vmatmul.mubr.f32.gmra.mxu0 %v1561
    %v1628 = vpop.f32.mrf.mxu0
    %v1629 = vadd.f32 0.0, %v1628
    %v1630 = vpop.f32.mrf.mxu0
    %1631 = vdwg.mxu0
    %1632 = vmatprep.subr.mxu0 0.0
    %1633 = vmatpush1.msra.mxu0 %v111
    %1634 = vmatprep.subr.mxu0 0.0
    %1635 = vmatpush1.msra.mxu0 %v110
    %1636 = vmatprep.subr.mxu0 0.0
    %1637 = vmatpush1.msra.mxu0 %v109
    %1638 = vmatprep.subr.mxu0 0.0
    %1639 = vmatpush1.msra.mxu0 %v108
    %1640 = vmatprep.subr.mxu0 0.0
    %1641 = vmatpush1.msra.mxu0 %v107
    %1642 = vmatprep.subr.mxu0 0.0
    %1643 = vmatpush1.msra.mxu0 %v106
    %1644 = vmatprep.subr.mxu0 0.0
    %1645 = vmatpush1.msra.mxu0 %v105
    %1646 = vmatprep.subr.mxu0 0.0
    %1647 = vmatpush1.msra.mxu0 %v104
    %1648 = vmatprep.subr.mxu0 0.0
    %1649 = vmatpush1.msra.mxu0 %v103
    %1650 = vmatprep.subr.mxu0 0.0
    %1651 = vmatpush1.msra.mxu0 %v102
    %1652 = vmatprep.subr.mxu0 0.0
    %1653 = vmatpush1.msra.mxu0 %v101
    %1654 = vmatprep.subr.mxu0 0.0
    %1655 = vmatpush1.msra.mxu0 %v100
    %1656 = vmatprep.subr.mxu0 0.0
    %1657 = vmatpush1.msra.mxu0 %v99
    %1658 = vmatprep.subr.mxu0 0.0
    %1659 = vmatpush1.msra.mxu0 %v98
    %1660 = vmatprep.subr.mxu0 0.0
    %1661 = vmatpush1.msra.mxu0 %v97
    %1662 = vmatprep.subr.mxu0 0.0
    %1663 = vmatpush1.msra.mxu0 %v96
    %1664 = vmatprep.subr.mxu0 0.0
    %1665 = vmatpush2.msra.mxu0 0.0
    %1666 = vmatprep.subr.mxu0 0.0
    %1667 = vmatpush2.msra.mxu0 0.0
    %1668 = vmatprep.subr.mxu0 0.0
    %1669 = vmatpush2.msra.mxu0 0.0
    %1670 = vmatprep.subr.mxu0 0.0
    %1671 = vmatpush2.msra.mxu0 0.0
    %1672 = vmatprep.subr.mxu0 0.0
    %1673 = vmatpush2.msra.mxu0 0.0
    %1674 = vmatprep.subr.mxu0 0.0
    %1675 = vmatpush2.msra.mxu0 0.0
    %1676 = vmatprep.subr.mxu0 0.0
    %1677 = vmatpush2.msra.mxu0 0.0
    %1678 = vmatprep.subr.mxu0 0.0
    %1679 = vmatpush2.msra.mxu0 0.0
    %1680 = vmatprep.subr.mxu0 0.0
    %1681 = vmatpush2.msra.mxu0 0.0
    %1682 = vmatprep.subr.mxu0 0.0
    %1683 = vmatpush2.msra.mxu0 0.0
    %1684 = vmatprep.subr.mxu0 0.0
    %1685 = vmatpush2.msra.mxu0 0.0
    %1686 = vmatprep.subr.mxu0 0.0
    %1687 = vmatpush2.msra.mxu0 0.0
    %1688 = vmatprep.subr.mxu0 0.0
    %1689 = vmatpush2.msra.mxu0 0.0
    %1690 = vmatprep.subr.mxu0 0.0
    %1691 = vmatpush2.msra.mxu0 0.0
    %1692 = vmatprep.subr.mxu0 0.0
    %1693 = vmatpush2.msra.mxu0 0.0
    %1694 = vmatprep.subr.mxu0 0.0
    %1695 = vmatpush2.msra.mxu0 0.0
    %1696 = vmatprep.mubr.f32.mxu0 0.0
    %1697 = vmatmul.mubr.f32.gmra.mxu0 %v1480
    %v1698 = vpop.f32.mrf.mxu0
    %v1699 = vadd.f32 %v1629, %v1698
    %v1700 = vpop.f32.mrf.mxu0
    %1701 = vdwg.mxu0
    %v1702 = vadd.f32 %v1699, %v87
    %v1703 = vtanh.pop %v1702
    %s1704 = scalar_lea.vmem %s0, 56
    %v1705 = vld [vmem:[%s1704] sm:$0xff]
    %1707 = vset.pattern.permute.xlu0 0
    %1708 = vperm.xlu0 %1707, %v1705
    %v1709 = vpop.permute.xlu0 %1708
    %v1711 = vmul.f32 %v1709, %v94
    %v1712 = vadd.f32 %v80, %v1711
    %1713 = vmatprep.subr.mxu0 0.0
    %1714 = vmatpush1.msra.mxu0 %v135
    %1715 = vmatprep.subr.mxu0 0.0
    %1716 = vmatpush1.msra.mxu0 %v134
    %1717 = vmatprep.subr.mxu0 0.0
    %1718 = vmatpush1.msra.mxu0 %v133
    %1719 = vmatprep.subr.mxu0 0.0
    %1720 = vmatpush1.msra.mxu0 %v132
    %1721 = vmatprep.subr.mxu0 0.0
    %1722 = vmatpush1.msra.mxu0 %v131
    %1723 = vmatprep.subr.mxu0 0.0
    %1724 = vmatpush1.msra.mxu0 %v130
    %1725 = vmatprep.subr.mxu0 0.0
    %1726 = vmatpush1.msra.mxu0 %v129
    %1727 = vmatprep.subr.mxu0 0.0
    %1728 = vmatpush1.msra.mxu0 %v128
    %1729 = vmatprep.subr.mxu0 0.0
    %1730 = vmatpush1.msra.mxu0 %v127
    %1731 = vmatprep.subr.mxu0 0.0
    %1732 = vmatpush1.msra.mxu0 %v126
    %1733 = vmatprep.subr.mxu0 0.0
    %1734 = vmatpush1.msra.mxu0 %v125
    %1735 = vmatprep.subr.mxu0 0.0
    %1736 = vmatpush1.msra.mxu0 %v124
    %1737 = vmatprep.subr.mxu0 0.0
    %1738 = vmatpush1.msra.mxu0 %v123
    %1739 = vmatprep.subr.mxu0 0.0
    %1740 = vmatpush1.msra.mxu0 %v122
    %1741 = vmatprep.subr.mxu0 0.0
    %1742 = vmatpush1.msra.mxu0 %v121
    %1743 = vmatprep.subr.mxu0 0.0
    %1744 = vmatpush1.msra.mxu0 %v120
    %1745 = vmatprep.subr.mxu0 0.0
    %1746 = vmatpush2.msra.mxu0 0.0
    %1747 = vmatprep.subr.mxu0 0.0
    %1748 = vmatpush2.msra.mxu0 0.0
    %1749 = vmatprep.subr.mxu0 0.0
    %1750 = vmatpush2.msra.mxu0 0.0
    %1751 = vmatprep.subr.mxu0 0.0
    %1752 = vmatpush2.msra.mxu0 0.0
    %1753 = vmatprep.subr.mxu0 0.0
    %1754 = vmatpush2.msra.mxu0 0.0
    %1755 = vmatprep.subr.mxu0 0.0
    %1756 = vmatpush2.msra.mxu0 0.0
    %1757 = vmatprep.subr.mxu0 0.0
    %1758 = vmatpush2.msra.mxu0 0.0
    %1759 = vmatprep.subr.mxu0 0.0
    %1760 = vmatpush2.msra.mxu0 0.0
    %1761 = vmatprep.subr.mxu0 0.0
    %1762 = vmatpush2.msra.mxu0 0.0
    %1763 = vmatprep.subr.mxu0 0.0
    %1764 = vmatpush2.msra.mxu0 0.0
    %1765 = vmatprep.subr.mxu0 0.0
    %1766 = vmatpush2.msra.mxu0 0.0
    %1767 = vmatprep.subr.mxu0 0.0
    %1768 = vmatpush2.msra.mxu0 0.0
    %1769 = vmatprep.subr.mxu0 0.0
    %1770 = vmatpush2.msra.mxu0 0.0
    %1771 = vmatprep.subr.mxu0 0.0
    %1772 = vmatpush2.msra.mxu0 0.0
    %1773 = vmatprep.subr.mxu0 0.0
    %1774 = vmatpush2.msra.mxu0 0.0
    %1775 = vmatprep.subr.mxu0 0.0
    %1776 = vmatpush2.msra.mxu0 0.0
    %1777 = vmatprep.mubr.f32.mxu0 0.0
    %1778 = vmatmul.mubr.f32.gmra.mxu0 %v1561
    %v1779 = vpop.f32.mrf.mxu0
    %v1780 = vadd.f32 0.0, %v1779
    %v1781 = vpop.f32.mrf.mxu0
    %1782 = vdwg.mxu0
    %v1783 = vadd.f32 %v1712, %v1780
    %v1784 = vtanh.pop %v1783
    %1785 = vmatprep.subr.mxu0 0.0
    %1786 = vmatpush1.msra.mxu0 %v223
    %1787 = vmatprep.subr.mxu0 0.0
    %1788 = vmatpush1.msra.mxu0 %v222
    %1789 = vmatprep.subr.mxu0 0.0
    %1790 = vmatpush1.msra.mxu0 %v221
    %1791 = vmatprep.subr.mxu0 0.0
    %1792 = vmatpush1.msra.mxu0 %v220
    %1793 = vmatprep.subr.mxu0 0.0
    %1794 = vmatpush1.msra.mxu0 %v219
    %1795 = vmatprep.subr.mxu0 0.0
    %1796 = vmatpush1.msra.mxu0 %v218
    %1797 = vmatprep.subr.mxu0 0.0
    %1798 = vmatpush1.msra.mxu0 %v217
    %1799 = vmatprep.subr.mxu0 0.0
    %1800 = vmatpush1.msra.mxu0 %v216
    %1801 = vmatprep.subr.mxu0 0.0
    %1802 = vmatpush1.msra.mxu0 %v215
    %1803 = vmatprep.subr.mxu0 0.0
    %1804 = vmatpush1.msra.mxu0 %v214
    %1805 = vmatprep.subr.mxu0 0.0
    %1806 = vmatpush1.msra.mxu0 %v213
    %1807 = vmatprep.subr.mxu0 0.0
    %1808 = vmatpush1.msra.mxu0 %v212
    %1809 = vmatprep.subr.mxu0 0.0
    %1810 = vmatpush1.msra.mxu0 %v211
    %1811 = vmatprep.subr.mxu0 0.0
    %1812 = vmatpush1.msra.mxu0 %v210
    %1813 = vmatprep.subr.mxu0 0.0
    %1814 = vmatpush1.msra.mxu0 %v209
    %1815 = vmatprep.subr.mxu0 0.0
    %1816 = vmatpush1.msra.mxu0 %v208
    %1817 = vmatprep.subr.mxu0 0.0
    %1818 = vmatpush2.msra.mxu0 0.0
    %1819 = vmatprep.subr.mxu0 0.0
    %1820 = vmatpush2.msra.mxu0 0.0
    %1821 = vmatprep.subr.mxu0 0.0
    %1822 = vmatpush2.msra.mxu0 0.0
    %1823 = vmatprep.subr.mxu0 0.0
    %1824 = vmatpush2.msra.mxu0 0.0
    %1825 = vmatprep.subr.mxu0 0.0
    %1826 = vmatpush2.msra.mxu0 0.0
    %1827 = vmatprep.subr.mxu0 0.0
    %1828 = vmatpush2.msra.mxu0 0.0
    %1829 = vmatprep.subr.mxu0 0.0
    %1830 = vmatpush2.msra.mxu0 0.0
    %1831 = vmatprep.subr.mxu0 0.0
    %1832 = vmatpush2.msra.mxu0 0.0
    %1833 = vmatprep.subr.mxu0 0.0
    %1834 = vmatpush2.msra.mxu0 0.0
    %1835 = vmatprep.subr.mxu0 0.0
    %1836 = vmatpush2.msra.mxu0 0.0
    %1837 = vmatprep.subr.mxu0 0.0
    %1838 = vmatpush2.msra.mxu0 0.0
    %1839 = vmatprep.subr.mxu0 0.0
    %1840 = vmatpush2.msra.mxu0 0.0
    %1841 = vmatprep.subr.mxu0 0.0
    %1842 = vmatpush2.msra.mxu0 0.0
    %1843 = vmatprep.subr.mxu0 0.0
    %1844 = vmatpush2.msra.mxu0 0.0
    %1845 = vmatprep.subr.mxu0 0.0
    %1846 = vmatpush2.msra.mxu0 0.0
    %1847 = vmatprep.subr.mxu0 0.0
    %1848 = vmatpush2.msra.mxu0 0.0
    %1849 = vmatprep.mubr.f32.mxu0 0.0
    %1850 = vmatmul.mubr.f32.gmra.mxu0 %v1784
    %v1851 = vpop.f32.mrf.mxu0
    %v1852 = vadd.f32 0.0, %v1851
    %v1853 = vpop.f32.mrf.mxu0
    %1854 = vdwg.mxu0
    %1855 = vmatprep.subr.mxu0 0.0
    %1856 = vmatpush1.msra.mxu0 %v111
    %1857 = vmatprep.subr.mxu0 0.0
    %1858 = vmatpush1.msra.mxu0 %v110
    %1859 = vmatprep.subr.mxu0 0.0
    %1860 = vmatpush1.msra.mxu0 %v109
    %1861 = vmatprep.subr.mxu0 0.0
    %1862 = vmatpush1.msra.mxu0 %v108
    %1863 = vmatprep.subr.mxu0 0.0
    %1864 = vmatpush1.msra.mxu0 %v107
    %1865 = vmatprep.subr.mxu0 0.0
    %1866 = vmatpush1.msra.mxu0 %v106
    %1867 = vmatprep.subr.mxu0 0.0
    %1868 = vmatpush1.msra.mxu0 %v105
    %1869 = vmatprep.subr.mxu0 0.0
    %1870 = vmatpush1.msra.mxu0 %v104
    %1871 = vmatprep.subr.mxu0 0.0
    %1872 = vmatpush1.msra.mxu0 %v103
    %1873 = vmatprep.subr.mxu0 0.0
    %1874 = vmatpush1.msra.mxu0 %v102
    %1875 = vmatprep.subr.mxu0 0.0
    %1876 = vmatpush1.msra.mxu0 %v101
    %1877 = vmatprep.subr.mxu0 0.0
    %1878 = vmatpush1.msra.mxu0 %v100
    %1879 = vmatprep.subr.mxu0 0.0
    %1880 = vmatpush1.msra.mxu0 %v99
    %1881 = vmatprep.subr.mxu0 0.0
    %1882 = vmatpush1.msra.mxu0 %v98
    %1883 = vmatprep.subr.mxu0 0.0
    %1884 = vmatpush1.msra.mxu0 %v97
    %1885 = vmatprep.subr.mxu0 0.0
    %1886 = vmatpush1.msra.mxu0 %v96
    %1887 = vmatprep.subr.mxu0 0.0
    %1888 = vmatpush2.msra.mxu0 0.0
    %1889 = vmatprep.subr.mxu0 0.0
    %1890 = vmatpush2.msra.mxu0 0.0
    %1891 = vmatprep.subr.mxu0 0.0
    %1892 = vmatpush2.msra.mxu0 0.0
    %1893 = vmatprep.subr.mxu0 0.0
    %1894 = vmatpush2.msra.mxu0 0.0
    %1895 = vmatprep.subr.mxu0 0.0
    %1896 = vmatpush2.msra.mxu0 0.0
    %1897 = vmatprep.subr.mxu0 0.0
    %1898 = vmatpush2.msra.mxu0 0.0
    %1899 = vmatprep.subr.mxu0 0.0
    %1900 = vmatpush2.msra.mxu0 0.0
    %1901 = vmatprep.subr.mxu0 0.0
    %1902 = vmatpush2.msra.mxu0 0.0
    %1903 = vmatprep.subr.mxu0 0.0
    %1904 = vmatpush2.msra.mxu0 0.0
    %1905 = vmatprep.subr.mxu0 0.0
    %1906 = vmatpush2.msra.mxu0 0.0
    %1907 = vmatprep.subr.mxu0 0.0
    %1908 = vmatpush2.msra.mxu0 0.0
    %1909 = vmatprep.subr.mxu0 0.0
    %1910 = vmatpush2.msra.mxu0 0.0
    %1911 = vmatprep.subr.mxu0 0.0
    %1912 = vmatpush2.msra.mxu0 0.0
    %1913 = vmatprep.subr.mxu0 0.0
    %1914 = vmatpush2.msra.mxu0 0.0
    %1915 = vmatprep.subr.mxu0 0.0
    %1916 = vmatpush2.msra.mxu0 0.0
    %1917 = vmatprep.subr.mxu0 0.0
    %1918 = vmatpush2.msra.mxu0 0.0
    %1919 = vmatprep.mubr.f32.mxu0 0.0
    %1920 = vmatmul.mubr.f32.gmra.mxu0 %v1703
    %v1921 = vpop.f32.mrf.mxu0
    %v1922 = vadd.f32 %v1852, %v1921
    %v1923 = vpop.f32.mrf.mxu0
    %1924 = vdwg.mxu0
    %v1925 = vadd.f32 %v1922, %v87
    %v1926 = vtanh.pop %v1925
    %v1927 = vld [vmem:[%s7] sm:$0x1]
    %v1929 = vlaneseq
    %v1930 = vshrl.u32 %v1929, 7
    %v1931 = vsub.s32 0, %v1930
    %v1932 = vrot.slane %v1927, %v1931
    %v1934 = vmul.f32 %v1926, %v1932
    %1935 = vadd.xlane.f32.xlu0 %v1934
    %v1936 = vpop.xlane.xlu0 %1935
    %v1937 = vld [vmem:[#allocation2] sm:$0x1]
    %v1939 = vlaneseq
    %v1940 = vshrl.u32 %v1939, 7
    %v1941 = vsub.s32 0, %v1940
    %v1942 = vrot.slane %v1937, %v1941
    %v1944 = vadd.f32 %v1936, %v1942
    %vm1945 = vcmask 7168
    %1946 = vst.msk [vmem:[%s9] sm:$0xff] %vm1945, %v1944
    // Predicated region
    $region50: #{tpu_custom_call.1} parent=1 // pred_check
      _
    $region51: #{tpu_custom_call.1} parent=1 // pred_check_branch
      %1948 = sbr.rel (0) target = $region53
    $region52: #{tpu_custom_call.1} parent=1 // pred_region
      _
    $region53: #{tpu_custom_call.1} parent=1 // pred_fallthru
      _
    // Predicated region
    $region54: #{tpu_custom_call.1} parent=1 // pred_check
      _
    $region55: #{tpu_custom_call.1} parent=1 // pred_check_branch
      %1950 = sbr.rel (0) target = $region57
    $region56: #{tpu_custom_call.1} parent=1 // pred_region
      _
    $region57: #{tpu_custom_call.1} parent=1 // pred_fallthru
      _
    %1951 = vsyncpa [#allocation4], 1
    %1952 = vsyncpa [#allocation6], 1

</llo_original>
